<compile_context>
chip_gen: v5e
topology: v5e:2x2
jax: 0.10.0
libtpu: 0.0.40
codegen_flags: <defaults>
</compile_context>

<pallas_src>
import jax
import jax.numpy as jnp
from jax.experimental import pallas as pl
from jax.experimental.pallas import tpu as pltpu

LEAKY_SLOPE = 0.2
BN_EPS = 1e-5
LANE = 128
SUBLANE = 8
COMPUTE_DTYPE = jnp.bfloat16  # MXU operand dtype; accumulation stays f32.


# ----------------------------------------------------------------------------
# Pallas kernels
# ----------------------------------------------------------------------------
def _hidden2(x_ref, w1_ref, b1_ref, w2_ref):
    """h2 = leaky(x @ W1 + b1) @ W2 for the current row tile (f32 result)."""
    h1 = jnp.dot(x_ref[...], w1_ref[...], preferred_element_type=jnp.float32)
    h1 = h1 + b1_ref[...]
    h1 = jnp.where(h1 > 0, h1, LEAKY_SLOPE * h1)
    return jnp.dot(h1.astype(w2_ref.dtype), w2_ref[...],
                   preferred_element_type=jnp.float32)


def _stats_kernel(x_ref, w1_ref, b1_ref, w2_ref, stats_ref):
    """Pass 1: per-tile per-channel sum (row 0) and sum-of-squares (row 1)."""
    h2 = _hidden2(x_ref, w1_ref, b1_ref, w2_ref)            # (tile_m, c2) f32
    c2 = stats_ref.shape[1]
    s = jnp.sum(h2, axis=0, keepdims=True)                   # (1, c2)
    sq = jnp.sum(h2 * h2, axis=0, keepdims=True)             # (1, c2)
    row = jax.lax.broadcasted_iota(jnp.int32, (SUBLANE, c2), 0)
    stats_ref[...] = jnp.where(
        row == 0, jnp.broadcast_to(s, (SUBLANE, c2)),
        jnp.where(row == 1, jnp.broadcast_to(sq, (SUBLANE, c2)), 0.0))


def _fused_fwd_kernel(x_ref, w1_ref, b1_ref, w2_ref, scale_ref, shift_ref,
                      w3_ref, out_ref):
    """Pass 2: recompute h2, folded BN + LeakyReLU, final 1x1 conv (padded)."""
    h2 = _hidden2(x_ref, w1_ref, b1_ref, w2_ref)             # (tile_m, c2) f32
    y = h2 * scale_ref[...] + shift_ref[...]                 # BN as scale/shift
    y = jnp.where(y > 0, y, LEAKY_SLOPE * y)
    out_ref[...] = jnp.dot(y.astype(w3_ref.dtype), w3_ref[...],
                           preferred_element_type=jnp.float32)


# ----------------------------------------------------------------------------
# Wrapper
# ----------------------------------------------------------------------------
def _round_up(v, m):
    return (v + m - 1) // m * m


def _pick_tile_m(m):
    """Largest row tile that divides M and still leaves >=2 grid steps."""
    for t in (2048, 1024, 512, 256, 128, 64, 32, 16, 8):
        if m % t == 0 and m // t >= 2:
            return t
    return m


def pixel_discriminator_forward(x_nchw, params):
    n, cin, h, w = x_nchw.shape
    m = n * h * w
    x = jnp.transpose(x_nchw, (0, 2, 3, 1)).reshape(m, cin).astype(jnp.float32)

    c1 = params["w1"].shape[1]       # ndf
    c2 = params["w2"].shape[1]       # 2 * ndf
    cout = params["w3"].shape[1]     # 1

    # Pad the tiny input-channel axis up to a sublane multiple for the MXU.
    cin_p = _round_up(cin, SUBLANE)
    xc = jnp.zeros((m, cin_p), COMPUTE_DTYPE).at[:, :cin].set(
        x.astype(COMPUTE_DTYPE))
    w1 = jnp.zeros((cin_p, c1), COMPUTE_DTYPE).at[:cin, :].set(
        params["w1"].astype(COMPUTE_DTYPE))
    b1 = params["b1"].reshape(1, c1).astype(jnp.float32)
    w2 = params["w2"].astype(COMPUTE_DTYPE)

    tile_m = _pick_tile_m(m)
    num_tiles = m // tile_m
    cp = pltpu.CompilerParams(dimension_semantics=("parallel",))

    # ---- pass 1: per-tile BN statistics --------------------------------
    stats = pl.pallas_call(
        _stats_kernel,
        out_shape=jax.ShapeDtypeStruct((num_tiles * SUBLANE, c2), jnp.float32),
        grid=(num_tiles,),
        in_specs=[
            pl.BlockSpec((tile_m, cin_p), lambda i: (i, 0)),
            pl.BlockSpec((cin_p, c1), lambda i: (0, 0)),
            pl.BlockSpec((1, c1), lambda i: (0, 0)),
            pl.BlockSpec((c1, c2), lambda i: (0, 0)),
        ],
        out_specs=pl.BlockSpec((SUBLANE, c2), lambda i: (i, 0)),
        compiler_params=cp,
    )(xc, w1, b1, w2)

    # Tiny (num_tiles, 8, c2) reduction -> folded BN scale/shift (plain JAX).
    stats = stats.reshape(num_tiles, SUBLANE, c2)
    total = jnp.sum(stats[:, 0, :], axis=0)
    total_sq = jnp.sum(stats[:, 1, :], axis=0)
    mean = total / m
    var = total_sq / m - mean * mean          # biased variance (train-mode BN)
    inv = jax.lax.rsqrt(var + BN_EPS)
    scale = (params["gamma"] * inv).reshape(1, c2).astype(jnp.float32)
    shift = (params["beta"] - mean * params["gamma"] * inv).reshape(
        1, c2).astype(jnp.float32)

    # Final 1x1 conv: pad Cout=1 -> 128 lanes so the output store is lane-dense.
    w3_pad = jnp.zeros((c2, LANE), COMPUTE_DTYPE).at[:, :cout].set(
        params["w3"].astype(COMPUTE_DTYPE))

    # ---- pass 2: fused conv1 + conv2 + BN + LeakyReLU + conv3 -----------
    out_pad = pl.pallas_call(
        _fused_fwd_kernel,
        out_shape=jax.ShapeDtypeStruct((m, LANE), jnp.float32),
        grid=(num_tiles,),
        in_specs=[
            pl.BlockSpec((tile_m, cin_p), lambda i: (i, 0)),
            pl.BlockSpec((cin_p, c1), lambda i: (0, 0)),
            pl.BlockSpec((1, c1), lambda i: (0, 0)),
            pl.BlockSpec((c1, c2), lambda i: (0, 0)),
            pl.BlockSpec((1, c2), lambda i: (0, 0)),
            pl.BlockSpec((1, c2), lambda i: (0, 0)),
            pl.BlockSpec((c2, LANE), lambda i: (0, 0)),
        ],
        out_specs=pl.BlockSpec((tile_m, LANE), lambda i: (i, 0)),
        compiler_params=cp,
    )(xc, w1, b1, w2, scale, shift, w3_pad)

    out = out_pad[:, :cout].reshape(n, h, w, cout)
    return jnp.transpose(out, (0, 3, 1, 2))  # NHWC -> NCHW


# ----------------------------------------------------------------------------
# Pure-JAX reference (same bf16 operand / f32 accumulation policy)
# ----------------------------------------------------------------------------
def pixel_discriminator_reference(x_nchw, params):
    n, cin, h, w = x_nchw.shape
    x = jnp.transpose(x_nchw, (0, 2, 3, 1)).reshape(n * h * w, cin)
    xc = x.astype(COMPUTE_DTYPE)
    h1 = jnp.dot(xc, params["w1"].astype(COMPUTE_DTYPE),
                 preferred_element_type=jnp.float32) + params["b1"][None, :]
    h1 = jnp.where(h1 > 0, h1, LEAKY_SLOPE * h1)
    h2 = jnp.dot(h1.astype(COMPUTE_DTYPE), params["w2"].astype(COMPUTE_DTYPE),
                 preferred_element_type=jnp.float32)
    mean = jnp.mean(h2, axis=0)
    var = jnp.mean(h2 * h2, axis=0) - mean * mean
    inv = jax.lax.rsqrt(var + BN_EPS)
    y = ((h2 - mean[None, :]) * inv[None, :] * params["gamma"][None, :]
         + params["beta"][None, :])
    y = jnp.where(y > 0, y, LEAKY_SLOPE * y)
    out = jnp.dot(y.astype(COMPUTE_DTYPE), params["w3"].astype(COMPUTE_DTYPE),
                  preferred_element_type=jnp.float32)
    out = out.reshape(n, h, w, params["w3"].shape[1])
    return jnp.transpose(out, (0, 3, 1, 2))


# ----------------------------------------------------------------------------
# Parameters
# ----------------------------------------------------------------------------
def init_params(key, input_nc, ndf=64):
    """Deterministic synthetic parameters matching PixelDiscriminator shapes.

    use_bias = False for conv2/conv3 (norm_layer is BatchNorm2d).
    Weights stored as (Cin, Cout) matrices since kernel_size == 1.
    """
    k1, kb, k2, k3 = jax.random.split(key, 4)
    return dict(
        w1=0.02 * jax.random.normal(k1, (input_nc, ndf), jnp.float32),
        b1=0.01 * jax.random.normal(kb, (ndf,), jnp.float32),
        w2=0.02 * jax.random.normal(k2, (ndf, 2 * ndf), jnp.float32),
        gamma=jnp.ones((2 * ndf,), jnp.float32),
        beta=jnp.zeros((2 * ndf,), jnp.float32),
        w3=0.02 * jax.random.normal(k3, (2 * ndf, 1), jnp.float32),
    )


# ----------------------------------------------------------------------------
if __name__ == "__main__":
    key = jax.random.PRNGKey(0)
    kx, kp = jax.random.split(key)

    N, CIN, H, W = 2, 4, 16, 16
    x = jax.random.normal(kx, (N, CIN, H, W), jnp.float32)
    params = init_params(kp, input_nc=CIN, ndf=64)

    fwd = jax.jit(lambda inp: pixel_discriminator_forward(inp, params))
    out = jax.block_until_ready(fwd(x))

    assert out.shape == (N, 1, H, W), out.shape
    assert out.dtype == jnp.float32
    assert bool(jnp.all(jnp.isfinite(out)))

    ref = jax.block_until_ready(
        jax.jit(lambda inp: pixel_discriminator_reference(inp, params))(x))
    assert bool(jnp.allclose(out, ref, atol=1e-2, rtol=1e-2)), float(
        jnp.max(jnp.abs(out - ref)))

    print("KERNEL_OK")
</pallas_src>

<mosaic_0001>
module attributes {stable_mosaic.version = 11 : i64} {
  func.func @_stats_kernel(%arg0: i32, %arg1: memref<256x8xbf16, #tpu.memory_space<vmem>>, %arg2: memref<8x64xbf16, #tpu.memory_space<vmem>>, %arg3: memref<1x64xf32, #tpu.memory_space<vmem>>, %arg4: memref<64x128xbf16, #tpu.memory_space<vmem>>, %arg5: memref<8x128xf32, #tpu.memory_space<vmem>>) attributes {dimension_semantics = [#tpu.dimension_semantics<parallel>], iteration_bounds = array<i64: 2>, scalar_prefetch = 0 : i64, scratch_operands = 0 : i64, tpu.core_type = #tpu.core_type<tc>, window_params = [{transform_indices = @transform_0, window_bounds = array<i64: 256, 8>}, {pipeline_mode = #tpu.pipeline_mode<synchronous>, transform_indices = @transform_1, window_bounds = array<i64: 8, 64>}, {pipeline_mode = #tpu.pipeline_mode<synchronous>, transform_indices = @transform_2, window_bounds = array<i64: 1, 64>}, {pipeline_mode = #tpu.pipeline_mode<synchronous>, transform_indices = @transform_3, window_bounds = array<i64: 64, 128>}, {transform_indices = @transform_4, window_bounds = array<i64: 8, 128>}]} {
    %c0 = arith.constant 0 : index
    %c0_0 = arith.constant 0 : index
    %0 = vector.load %arg1[%c0, %c0_0] : memref<256x8xbf16, #tpu.memory_space<vmem>>, vector<256x8xbf16>
    %c0_1 = arith.constant 0 : index
    %c0_2 = arith.constant 0 : index
    %1 = vector.load %arg2[%c0_1, %c0_2] : memref<8x64xbf16, #tpu.memory_space<vmem>>, vector<8x64xbf16>
    %cst = arith.constant dense<0.000000e+00> : vector<256x64xf32>
    %2 = tpu.matmul %0, %1, %cst {dimension_numbers = #tpu.dot_dimension_numbers<[1], [0], [0], [1], [0, 0, 1, 1], [], []>} : vector<256x8xbf16>, vector<8x64xbf16>, vector<256x64xf32> -> vector<256x64xf32>
    %c0_3 = arith.constant 0 : index
    %c0_4 = arith.constant 0 : index
    %3 = vector.load %arg3[%c0_3, %c0_4] : memref<1x64xf32, #tpu.memory_space<vmem>>, vector<1x64xf32>
    %4 = vector.broadcast %3 : vector<1x64xf32> to vector<256x64xf32>
    %5 = arith.addf %2, %4 : vector<256x64xf32>
    %cst_5 = arith.constant 0.000000e+00 : f32
    %6 = vector.broadcast %cst_5 : f32 to vector<256x64xf32>
    %7 = arith.cmpf ogt, %5, %6 : vector<256x64xf32>
    %cst_6 = arith.constant 2.000000e-01 : f32
    %8 = vector.broadcast %cst_6 : f32 to vector<256x64xf32>
    %9 = arith.mulf %8, %5 : vector<256x64xf32>
    %10 = arith.select %7, %5, %9 : vector<256x64xi1>, vector<256x64xf32>
    %11 = arith.truncf %10 : vector<256x64xf32> to vector<256x64xbf16>
    %c0_7 = arith.constant 0 : index
    %c0_8 = arith.constant 0 : index
    %12 = vector.load %arg4[%c0_7, %c0_8] : memref<64x128xbf16, #tpu.memory_space<vmem>>, vector<64x128xbf16>
    %cst_9 = arith.constant dense<0.000000e+00> : vector<256x128xf32>
    %13 = tpu.matmul %11, %12, %cst_9 {dimension_numbers = #tpu.dot_dimension_numbers<[1], [0], [0], [1], [0, 0, 1, 1], [], []>} : vector<256x64xbf16>, vector<64x128xbf16>, vector<256x128xf32> -> vector<256x128xf32>
    %cst_10 = arith.constant dense<0.000000e+00> : vector<128xf32>
    %14 = vector.multi_reduction <add>, %13, %cst_10 [0] : vector<256x128xf32> to vector<128xf32>
    %15 = vector.shape_cast %14 : vector<128xf32> to vector<1x128xf32>
    %16 = arith.mulf %13, %13 : vector<256x128xf32>
    %cst_11 = arith.constant dense<0.000000e+00> : vector<128xf32>
    %17 = vector.multi_reduction <add>, %16, %cst_11 [0] : vector<256x128xf32> to vector<128xf32>
    %18 = vector.shape_cast %17 : vector<128xf32> to vector<1x128xf32>
    %19 = tpu.iota {dimensions = array<i32: 0>} : vector<8x128xi32>
    %c0_i32 = arith.constant 0 : i32
    %20 = vector.broadcast %c0_i32 : i32 to vector<8x128xi32>
    %21 = arith.cmpi eq, %19, %20 : vector<8x128xi32>
    %22 = vector.shape_cast %15 : vector<1x128xf32> to vector<1x128xf32>
    %23 = vector.broadcast %22 : vector<1x128xf32> to vector<8x128xf32>
    %c1_i32 = arith.constant 1 : i32
    %24 = vector.broadcast %c1_i32 : i32 to vector<8x128xi32>
    %25 = arith.cmpi eq, %19, %24 : vector<8x128xi32>
    %26 = vector.shape_cast %18 : vector<1x128xf32> to vector<1x128xf32>
    %27 = vector.broadcast %26 : vector<1x128xf32> to vector<8x128xf32>
    %cst_12 = arith.constant 0.000000e+00 : f32
    %28 = vector.broadcast %cst_12 : f32 to vector<8x128xf32>
    %29 = arith.select %25, %27, %28 : vector<8x128xi1>, vector<8x128xf32>
    %30 = arith.select %21, %23, %29 : vector<8x128xi1>, vector<8x128xf32>
    %c0_13 = arith.constant 0 : index
    %c0_14 = arith.constant 0 : index
    %31 = vector.load %arg5[%c0_13, %c0_14] : memref<8x128xf32, #tpu.memory_space<vmem>>, vector<8x128xf32>
    tpu.vector_store %arg5[%c0_13, %c0_14], %30 {strides = array<i32>} : memref<8x128xf32, #tpu.memory_space<vmem>>, vector<8x128xf32>,
    return
  }
  func.func @transform_0(%arg0: i32) -> (i32, i32) {
    %c0_i32 = arith.constant 0 : i32
    %c0_i32_0 = arith.constant 0 : i32
    return %arg0, %c0_i32 : i32, i32
  }
  func.func @transform_1(%arg0: i32) -> (i32, i32) {
    %c0_i32 = arith.constant 0 : i32
    %c0_i32_0 = arith.constant 0 : i32
    %c0_i32_1 = arith.constant 0 : i32
    return %c0_i32, %c0_i32_0 : i32, i32
  }
  func.func @transform_2(%arg0: i32) -> (i32, i32) {
    %c0_i32 = arith.constant 0 : i32
    %c0_i32_0 = arith.constant 0 : i32
    %c0_i32_1 = arith.constant 0 : i32
    return %c0_i32, %c0_i32_0 : i32, i32
  }
  func.func @transform_3(%arg0: i32) -> (i32, i32) {
    %c0_i32 = arith.constant 0 : i32
    %c0_i32_0 = arith.constant 0 : i32
    %c0_i32_1 = arith.constant 0 : i32
    return %c0_i32, %c0_i32_0 : i32, i32
  }
  func.func @transform_4(%arg0: i32) -> (i32, i32) {
    %c0_i32 = arith.constant 0 : i32
    %c0_i32_0 = arith.constant 0 : i32
    return %arg0, %c0_i32 : i32, i32
  }
}

module attributes {stable_mosaic.version = 11 : i64} {
  func.func @_fused_fwd_kernel(%arg0: i32, %arg1: memref<256x8xbf16, #tpu.memory_space<vmem>>, %arg2: memref<8x64xbf16, #tpu.memory_space<vmem>>, %arg3: memref<1x64xf32, #tpu.memory_space<vmem>>, %arg4: memref<64x128xbf16, #tpu.memory_space<vmem>>, %arg5: memref<1x128xf32, #tpu.memory_space<vmem>>, %arg6: memref<1x128xf32, #tpu.memory_space<vmem>>, %arg7: memref<128x128xbf16, #tpu.memory_space<vmem>>, %arg8: memref<256x128xf32, #tpu.memory_space<vmem>>) attributes {dimension_semantics = [#tpu.dimension_semantics<parallel>], iteration_bounds = array<i64: 2>, scalar_prefetch = 0 : i64, scratch_operands = 0 : i64, tpu.core_type = #tpu.core_type<tc>, window_params = [{transform_indices = @transform_0, window_bounds = array<i64: 256, 8>}, {pipeline_mode = #tpu.pipeline_mode<synchronous>, transform_indices = @transform_1, window_bounds = array<i64: 8, 64>}, {pipeline_mode = #tpu.pipeline_mode<synchronous>, transform_indices = @transform_2, window_bounds = array<i64: 1, 64>}, {pipeline_mode = #tpu.pipeline_mode<synchronous>, transform_indices = @transform_3, window_bounds = array<i64: 64, 128>}, {pipeline_mode = #tpu.pipeline_mode<synchronous>, transform_indices = @transform_4, window_bounds = array<i64: 1, 128>}, {pipeline_mode = #tpu.pipeline_mode<synchronous>, transform_indices = @transform_5, window_bounds = array<i64: 1, 128>}, {pipeline_mode = #tpu.pipeline_mode<synchronous>, transform_indices = @transform_6, window_bounds = array<i64: 128, 128>}, {transform_indices = @transform_7, window_bounds = array<i64: 256, 128>}]} {
    %c0 = arith.constant 0 : index
    %c0_0 = arith.constant 0 : index
    %0 = vector.load %arg1[%c0, %c0_0] : memref<256x8xbf16, #tpu.memory_space<vmem>>, vector<256x8xbf16>
    %c0_1 = arith.constant 0 : index
    %c0_2 = arith.constant 0 : index
    %1 = vector.load %arg2[%c0_1, %c0_2] : memref<8x64xbf16, #tpu.memory_space<vmem>>, vector<8x64xbf16>
    %cst = arith.constant dense<0.000000e+00> : vector<256x64xf32>
    %2 = tpu.matmul %0, %1, %cst {dimension_numbers = #tpu.dot_dimension_numbers<[1], [0], [0], [1], [0, 0, 1, 1], [], []>} : vector<256x8xbf16>, vector<8x64xbf16>, vector<256x64xf32> -> vector<256x64xf32>
    %c0_3 = arith.constant 0 : index
    %c0_4 = arith.constant 0 : index
    %3 = vector.load %arg3[%c0_3, %c0_4] : memref<1x64xf32, #tpu.memory_space<vmem>>, vector<1x64xf32>
    %4 = vector.broadcast %3 : vector<1x64xf32> to vector<256x64xf32>
    %5 = arith.addf %2, %4 : vector<256x64xf32>
    %cst_5 = arith.constant 0.000000e+00 : f32
    %6 = vector.broadcast %cst_5 : f32 to vector<256x64xf32>
    %7 = arith.cmpf ogt, %5, %6 : vector<256x64xf32>
    %cst_6 = arith.constant 2.000000e-01 : f32
    %8 = vector.broadcast %cst_6 : f32 to vector<256x64xf32>
    %9 = arith.mulf %8, %5 : vector<256x64xf32>
    %10 = arith.select %7, %5, %9 : vector<256x64xi1>, vector<256x64xf32>
    %11 = arith.truncf %10 : vector<256x64xf32> to vector<256x64xbf16>
    %c0_7 = arith.constant 0 : index
    %c0_8 = arith.constant 0 : index
    %12 = vector.load %arg4[%c0_7, %c0_8] : memref<64x128xbf16, #tpu.memory_space<vmem>>, vector<64x128xbf16>
    %cst_9 = arith.constant dense<0.000000e+00> : vector<256x128xf32>
    %13 = tpu.matmul %11, %12, %cst_9 {dimension_numbers = #tpu.dot_dimension_numbers<[1], [0], [0], [1], [0, 0, 1, 1], [], []>} : vector<256x64xbf16>, vector<64x128xbf16>, vector<256x128xf32> -> vector<256x128xf32>
    %c0_10 = arith.constant 0 : index
    %c0_11 = arith.constant 0 : index
    %14 = vector.load %arg5[%c0_10, %c0_11] : memref<1x128xf32, #tpu.memory_space<vmem>>, vector<1x128xf32>
    %15 = vector.broadcast %14 : vector<1x128xf32> to vector<256x128xf32>
    %16 = arith.mulf %13, %15 : vector<256x128xf32>
    %c0_12 = arith.constant 0 : index
    %c0_13 = arith.constant 0 : index
    %17 = vector.load %arg6[%c0_12, %c0_13] : memref<1x128xf32, #tpu.memory_space<vmem>>, vector<1x128xf32>
    %18 = vector.broadcast %17 : vector<1x128xf32> to vector<256x128xf32>
    %19 = arith.addf %16, %18 : vector<256x128xf32>
    %cst_14 = arith.constant 0.000000e+00 : f32
    %20 = vector.broadcast %cst_14 : f32 to vector<256x128xf32>
    %21 = arith.cmpf ogt, %19, %20 : vector<256x128xf32>
    %cst_15 = arith.constant 2.000000e-01 : f32
    %22 = vector.broadcast %cst_15 : f32 to vector<256x128xf32>
    %23 = arith.mulf %22, %19 : vector<256x128xf32>
    %24 = arith.select %21, %19, %23 : vector<256x128xi1>, vector<256x128xf32>
    %25 = arith.truncf %24 : vector<256x128xf32> to vector<256x128xbf16>
    %c0_16 = arith.constant 0 : index
    %c0_17 = arith.constant 0 : index
    %26 = vector.load %arg7[%c0_16, %c0_17] : memref<128x128xbf16, #tpu.memory_space<vmem>>, vector<128x128xbf16>
    %cst_18 = arith.constant dense<0.000000e+00> : vector<256x128xf32>
    %27 = tpu.matmul %25, %26, %cst_18 {dimension_numbers = #tpu.dot_dimension_numbers<[1], [0], [0], [1], [0, 0, 1, 1], [], []>} : vector<256x128xbf16>, vector<128x128xbf16>, vector<256x128xf32> -> vector<256x128xf32>
    %c0_19 = arith.constant 0 : index
    %c0_20 = arith.constant 0 : index
    %28 = vector.load %arg8[%c0_19, %c0_20] : memref<256x128xf32, #tpu.memory_space<vmem>>, vector<256x128xf32>
    tpu.vector_store %arg8[%c0_19, %c0_20], %27 {strides = array<i32>} : memref<256x128xf32, #tpu.memory_space<vmem>>, vector<256x128xf32>,
    return
  }
  func.func @transform_0(%arg0: i32) -> (i32, i32) {
    %c0_i32 = arith.constant 0 : i32
    %c0_i32_0 = arith.constant 0 : i32
    return %arg0, %c0_i32 : i32, i32
  }
  func.func @transform_1(%arg0: i32) -> (i32, i32) {
    %c0_i32 = arith.constant 0 : i32
    %c0_i32_0 = arith.constant 0 : i32
    %c0_i32_1 = arith.constant 0 : i32
    return %c0_i32, %c0_i32_0 : i32, i32
  }
  func.func @transform_2(%arg0: i32) -> (i32, i32) {
    %c0_i32 = arith.constant 0 : i32
    %c0_i32_0 = arith.constant 0 : i32
    %c0_i32_1 = arith.constant 0 : i32
    return %c0_i32, %c0_i32_0 : i32, i32
  }
  func.func @transform_3(%arg0: i32) -> (i32, i32) {
    %c0_i32 = arith.constant 0 : i32
    %c0_i32_0 = arith.constant 0 : i32
    %c0_i32_1 = arith.constant 0 : i32
    return %c0_i32, %c0_i32_0 : i32, i32
  }
  func.func @transform_4(%arg0: i32) -> (i32, i32) {
    %c0_i32 = arith.constant 0 : i32
    %c0_i32_0 = arith.constant 0 : i32
    %c0_i32_1 = arith.constant 0 : i32
    return %c0_i32, %c0_i32_0 : i32, i32
  }
  func.func @transform_5(%arg0: i32) -> (i32, i32) {
    %c0_i32 = arith.constant 0 : i32
    %c0_i32_0 = arith.constant 0 : i32
    %c0_i32_1 = arith.constant 0 : i32
    return %c0_i32, %c0_i32_0 : i32, i32
  }
  func.func @transform_6(%arg0: i32) -> (i32, i32) {
    %c0_i32 = arith.constant 0 : i32
    %c0_i32_0 = arith.constant 0 : i32
    %c0_i32_1 = arith.constant 0 : i32
    return %c0_i32, %c0_i32_0 : i32, i32
  }
  func.func @transform_7(%arg0: i32) -> (i32, i32) {
    %c0_i32 = arith.constant 0 : i32
    %c0_i32_0 = arith.constant 0 : i32
    return %arg0, %c0_i32 : i32, i32
  }
}

</mosaic_0001>

<llo_original>
// kernel: _lambda_.2
$region0: #{_lambda_.2}
  #allocation0 [shape = 'u32[]', space=smem, size = 0x4, offset = 0x4, fixed_abs, tag = 'smem constant byte address 0x4 - core index']
  #allocation1 [shape = 'u32[72,128]{1,0:T(1,128)}', space=vmem, size = 0x9000, scoped, tag = 'internal scratch']
  %s0 = inlined_call_operand.vmem [shape: bf16[512,8], index: 0, kind: input, shape index: {}]
  %s1 = inlined_call_operand.vmem [shape: bf16[8,64], index: 1, kind: input, shape index: {}]
  %s2 = inlined_call_operand.vmem [shape: f32[1,64], index: 2, kind: input, shape index: {}]
  %s3 = inlined_call_operand.vmem [shape: bf16[64,128], index: 3, kind: input, shape index: {}]
  %s4 = inlined_call_operand.vmem [shape: f32[16,128], index: 4, kind: output, shape index: {}]
  %s5 = sld [smem:[#allocation0]]
  $region49: #{_lambda_.2} parent=0
    _
  %s7 = ssub.s32 1, %s5
  %s8 = scalar_select 0, %s7, %s5
  loop: start=0, step=1, limit=4
  $region2: #{_lambda_.2} parent=0 // loop_pre_header
    _
  $region3: #{_lambda_.2} parent=0 // loop_header
    %s10 = sphi 0, %s14
    %p11 = scmp.ge.s32.totalorder %s10, 4
    %s20 = sphi 0, %s22
    %s23 = sphi 0, %s20
    %s24 = sphi 0, %s23
    %s40 = sphi 0, %s24
    %s44 = sphi 0, %s44
    %s46 = sphi 0, %s44
    %s47 = sphi 0, %s46
    %s61 = sphi 0, %s47
    %s65 = sphi 0, %s65
    %s67 = sphi 0, %s65
    %s68 = sphi 0, %s67
    %s82 = sphi 0, %s68
    %s86 = sphi 0, %s86
    %s88 = sphi 0, %s86
    %s89 = sphi 0, %s88
    %s103 = sphi 0, %s89
    %s109 = sphi 0, %s111
    %s112 = sphi 0, %s109
    %s113 = sphi 0, %s112
    %s129 = sphi 0, %s113
  $region4: #{_lambda_.2} parent=0 // loop_header_branch
    %13 = sbr.rel (%p11) target = $region8
  $region5: #{_lambda_.2} parent=0 // loop_body
    %s15 = ssub.s32 %s10, 1
    %s16 = ssub.s32 %s10, 2
    %s17 = sadd.s32 %s10, 1
    %s18 = ssub.s32 %s10, %s17
    %p19 = scmp.eq.s32.totalorder %s18, 0
    %s21 = sadd.s32 %s20, 1
    %s22 = scalar_select %p19, %s20, %s21
    %p25 = pneg %p19
    %p26 = scmp.eq.s32.totalorder %s10, 1
    %p27 = por %p25, %p26
    %p28 = scmp.ne.s32.totalorder %s20, %s23
    %p29 = scmp.eq.s32.totalorder %s10, 0
    %p30 = por %p28, %p29
    %p31 = scmp.ne.s32.totalorder %s20, %s23
    %p32 = scmp.eq.s32.totalorder %s15, 1
    %p33 = por %p31, %p32
    %p34 = scmp.ne.s32.totalorder %s23, %s24
    %p35 = scmp.eq.s32.totalorder %s15, 0
    %p36 = por %p34, %p35
    %p37 = scmp.ne.s32.totalorder %s23, %s24
    %p38 = scmp.eq.s32.totalorder %s16, 1
    %p39 = por %p37, %p38
    %p41 = scmp.ne.s32.totalorder %s24, %s40
    %p42 = scmp.eq.s32.totalorder %s16, 0
    %p43 = por %p41, %p42
    %s45 = sadd.s32 %s44, 1
    %p48 = scmp.eq.s32.totalorder %s10, 1
    %p49 = scmp.ne.s32.totalorder %s44, %s46
    %p50 = scmp.eq.s32.totalorder %s10, 0
    %p51 = por %p49, %p50
    %p52 = scmp.ne.s32.totalorder %s44, %s46
    %p53 = scmp.eq.s32.totalorder %s15, 1
    %p54 = por %p52, %p53
    %p55 = scmp.ne.s32.totalorder %s46, %s47
    %p56 = scmp.eq.s32.totalorder %s15, 0
    %p57 = por %p55, %p56
    %p58 = scmp.ne.s32.totalorder %s46, %s47
    %p59 = scmp.eq.s32.totalorder %s16, 1
    %p60 = por %p58, %p59
    %p62 = scmp.ne.s32.totalorder %s47, %s61
    %p63 = scmp.eq.s32.totalorder %s16, 0
    %p64 = por %p62, %p63
    %s66 = sadd.s32 %s65, 1
    %p69 = scmp.eq.s32.totalorder %s10, 1
    %p70 = scmp.ne.s32.totalorder %s65, %s67
    %p71 = scmp.eq.s32.totalorder %s10, 0
    %p72 = por %p70, %p71
    %p73 = scmp.ne.s32.totalorder %s65, %s67
    %p74 = scmp.eq.s32.totalorder %s15, 1
    %p75 = por %p73, %p74
    %p76 = scmp.ne.s32.totalorder %s67, %s68
    %p77 = scmp.eq.s32.totalorder %s15, 0
    %p78 = por %p76, %p77
    %p79 = scmp.ne.s32.totalorder %s67, %s68
    %p80 = scmp.eq.s32.totalorder %s16, 1
    %p81 = por %p79, %p80
    %p83 = scmp.ne.s32.totalorder %s68, %s82
    %p84 = scmp.eq.s32.totalorder %s16, 0
    %p85 = por %p83, %p84
    %s87 = sadd.s32 %s86, 1
    %p90 = scmp.eq.s32.totalorder %s10, 1
    %p91 = scmp.ne.s32.totalorder %s86, %s88
    %p92 = scmp.eq.s32.totalorder %s10, 0
    %p93 = por %p91, %p92
    %p94 = scmp.ne.s32.totalorder %s86, %s88
    %p95 = scmp.eq.s32.totalorder %s15, 1
    %p96 = por %p94, %p95
    %p97 = scmp.ne.s32.totalorder %s88, %s89
    %p98 = scmp.eq.s32.totalorder %s15, 0
    %p99 = por %p97, %p98
    %p100 = scmp.ne.s32.totalorder %s88, %s89
    %p101 = scmp.eq.s32.totalorder %s16, 1
    %p102 = por %p100, %p101
    %p104 = scmp.ne.s32.totalorder %s89, %s103
    %p105 = scmp.eq.s32.totalorder %s16, 0
    %p106 = por %p104, %p105
    %s107 = ssub.s32 %s10, %s17
    %p108 = scmp.eq.s32.totalorder %s107, 0
    %s110 = sadd.s32 %s109, 1
    %s111 = scalar_select %p108, %s109, %s110
    %p114 = pneg %p108
    %p115 = scmp.eq.s32.totalorder %s10, 1
    %p116 = por %p114, %p115
    %p117 = scmp.ne.s32.totalorder %s109, %s112
    %p118 = scmp.eq.s32.totalorder %s10, 0
    %p119 = por %p117, %p118
    %p120 = scmp.ne.s32.totalorder %s109, %s112
    %p121 = scmp.eq.s32.totalorder %s15, 1
    %p122 = por %p120, %p121
    %p123 = scmp.ne.s32.totalorder %s112, %s113
    %p124 = scmp.eq.s32.totalorder %s15, 0
    %p125 = por %p123, %p124
    %p126 = scmp.ne.s32.totalorder %s112, %s113
    %p127 = scmp.eq.s32.totalorder %s16, 1
    %p128 = por %p126, %p127
    %p130 = scmp.ne.s32.totalorder %s113, %s129
    %p131 = scmp.eq.s32.totalorder %s16, 0
    %p132 = por %p130, %p131
    %p133 = scmp.le.s32.totalorder 1, %s10
    %p134 = scmp.lt.s32.totalorder %s10, 3
    %p135 = pnand %p133, %p134
    %p136 = pneg %p135
    // Predicated region
    $region9: #{_lambda_.2} parent=5 // pred_check
      _
    $region10: #{_lambda_.2} parent=5 // pred_check_branch
      %138 = sbr.rel (%p135) target = $region12
    $region11: #{_lambda_.2} parent=5 // pred_region
      %s139 = ssub.s32 %s10, 1
      // Predicated region
      $region13: #{_lambda_.2} parent=11 // pred_check
        %p140 = pneg %p57
      $region14: #{_lambda_.2} parent=11 // pred_check_branch
        %142 = sbr.rel (%p140) target = $region16
      $region15: #{_lambda_.2} parent=11 // pred_region
        _
      $region16: #{_lambda_.2} parent=11 // pred_fallthru
        _
      // Predicated region
      $region17: #{_lambda_.2} parent=11 // pred_check
        %p143 = pneg %p78
      $region18: #{_lambda_.2} parent=11 // pred_check_branch
        %145 = sbr.rel (%p143) target = $region20
      $region19: #{_lambda_.2} parent=11 // pred_region
        _
      $region20: #{_lambda_.2} parent=11 // pred_fallthru
        _
      // Predicated region
      $region21: #{_lambda_.2} parent=11 // pred_check
        %p146 = pneg %p99
      $region22: #{_lambda_.2} parent=11 // pred_check_branch
        %148 = sbr.rel (%p146) target = $region24
      $region23: #{_lambda_.2} parent=11 // pred_region
        _
      $region24: #{_lambda_.2} parent=11 // pred_fallthru
        _
    $region12: #{_lambda_.2} parent=5 // pred_fallthru
      _
    %p149 = scmp.lt.s32.totalorder %s10, 2
    // Predicated region
    $region25: #{_lambda_.2} parent=5 // pred_check
      %p150 = pneg %p149
    $region26: #{_lambda_.2} parent=5 // pred_check_branch
      %152 = sbr.rel (%p150) target = $region28
    $region27: #{_lambda_.2} parent=5 // pred_region
      // Predicated region
      $region29: #{_lambda_.2} parent=27 // pred_check
        %p153 = pneg %p30
      $region30: #{_lambda_.2} parent=27 // pred_check_branch
        %155 = sbr.rel (%p153) target = $region32
      $region31: #{_lambda_.2} parent=27 // pred_region
        %s156 = smul.u32 32, %s10
        %p157 = scmp.lt.s32.totalorder %s156, 63
        %s158 = scalar_select %p157, %s156, 63
        %s159 = smul.addr %s158, 4
        %s160 = scalar_lea.vmem %s0, %s159
        %s161 = smul.u32 32, %s10
      $region32: #{_lambda_.2} parent=27 // pred_fallthru
        _
    $region28: #{_lambda_.2} parent=5 // pred_fallthru
      _
    %p162 = scmp.le.s32.totalorder 1, %s10
    %p163 = scmp.lt.s32.totalorder %s10, 3
    %p164 = pnand %p162, %p163
    %p165 = pneg %p164
    // Predicated region
    $region33: #{_lambda_.2} parent=5 // pred_check
      _
    $region34: #{_lambda_.2} parent=5 // pred_check_branch
      %167 = sbr.rel (%p164) target = $region36
    $region35: #{_lambda_.2} parent=5 // pred_region
      %s168 = ssub.s32 %s10, 1
      %s169 = smul.u32 32, %s15
      %p170 = scmp.lt.s32.totalorder %s169, 63
      %s171 = scalar_select %p170, %s169, 63
      %s172 = smul.addr %s171, 4
      %s173 = scalar_lea.vmem %s0, %s172
      %p174 = pneg %p36
      %p175 = pneg %p33
      %p176 = pneg %p57
      %p177 = pneg %p54
      %p178 = pneg %p78
      %p179 = pneg %p75
      %p180 = pneg %p99
      %p181 = pneg %p96
      %p182 = pneg %p125
      %p183 = pneg %p122
      %p184 = scmp.lt.s32.totalorder %s15, 1
      %s185 = scalar_select %p184, %s15, 1
      %s186 = smul.addr %s185, 8
      %s187 = scalar_lea.vmem %s4, %s186
      %s188 = smul.u32 32, %s15
      %p189 = scmp.lt.s32.totalorder %s188, 63
      %s190 = scalar_select %p189, %s188, 63
      %s191 = smul.addr %s190, 4
      %s192 = scalar_lea.vmem %s0, %s191
      %s193 = smul.u32 32, %s15
      %p194 = scmp.lt.s32.totalorder %s15, 1
      %s195 = scalar_select %p194, %s15, 1
      %s196 = smul.addr %s195, 8
      %s197 = scalar_lea.vmem %s4, %s196
      %v199 = vld [vmem:[%s192] sm:$0xf]
      %v200 = vld [vmem:[%s192 + $0x4] sm:$0xf]
      %v201 = vld [vmem:[%s192 + $0x8] sm:$0xf]
      %v202 = vld [vmem:[%s192 + $0xc] sm:$0xf]
      %v203 = vld [vmem:[%s192 + $0x10] sm:$0xf]
      %v204 = vld [vmem:[%s192 + $0x14] sm:$0xf]
      %v205 = vld [vmem:[%s192 + $0x18] sm:$0xf]
      %v206 = vld [vmem:[%s192 + $0x1c] sm:$0xf]
      %v207 = vld [vmem:[%s192 + $0x20] sm:$0xf]
      %v208 = vld [vmem:[%s192 + $0x24] sm:$0xf]
      %v209 = vld [vmem:[%s192 + $0x28] sm:$0xf]
      %v210 = vld [vmem:[%s192 + $0x2c] sm:$0xf]
      %v211 = vld [vmem:[%s192 + $0x30] sm:$0xf]
      %v212 = vld [vmem:[%s192 + $0x34] sm:$0xf]
      %v213 = vld [vmem:[%s192 + $0x38] sm:$0xf]
      %v214 = vld [vmem:[%s192 + $0x3c] sm:$0xf]
      %v215 = vld [vmem:[%s192 + $0x40] sm:$0xf]
      %v216 = vld [vmem:[%s192 + $0x44] sm:$0xf]
      %v217 = vld [vmem:[%s192 + $0x48] sm:$0xf]
      %v218 = vld [vmem:[%s192 + $0x4c] sm:$0xf]
      %v219 = vld [vmem:[%s192 + $0x50] sm:$0xf]
      %v220 = vld [vmem:[%s192 + $0x54] sm:$0xf]
      %v221 = vld [vmem:[%s192 + $0x58] sm:$0xf]
      %v222 = vld [vmem:[%s192 + $0x5c] sm:$0xf]
      %v223 = vld [vmem:[%s192 + $0x60] sm:$0xf]
      %v224 = vld [vmem:[%s192 + $0x64] sm:$0xf]
      %v225 = vld [vmem:[%s192 + $0x68] sm:$0xf]
      %v226 = vld [vmem:[%s192 + $0x6c] sm:$0xf]
      %v227 = vld [vmem:[%s192 + $0x70] sm:$0xf]
      %v228 = vld [vmem:[%s192 + $0x74] sm:$0xf]
      %v229 = vld [vmem:[%s192 + $0x78] sm:$0xf]
      %v230 = vld [vmem:[%s192 + $0x7c] sm:$0xf]
      %v231 = vld [vmem:[%s1] sm:$0xf]
      %v232 = vld [vmem:[%s2] sm:$0x1]
      %v234 = vperm.slane %v232, 0
      %v268 = vunpack.c.l.b16 %v199
      %v269 = vunpack.c.l.b16 %v200
      %v270 = vunpack.c.l.b16 %v201
      %v271 = vunpack.c.l.b16 %v202
      %v272 = vunpack.c.l.b16 %v203
      %v273 = vunpack.c.l.b16 %v204
      %v274 = vunpack.c.l.b16 %v205
      %v275 = vunpack.c.l.b16 %v206
      %v276 = vunpack.c.l.b16 %v207
      %v277 = vunpack.c.l.b16 %v208
      %v278 = vunpack.c.l.b16 %v209
      %v279 = vunpack.c.l.b16 %v210
      %v280 = vunpack.c.l.b16 %v211
      %v281 = vunpack.c.l.b16 %v212
      %v282 = vunpack.c.l.b16 %v213
      %v283 = vunpack.c.l.b16 %v214
      %v284 = vunpack.c.l.b16 %v215
      %v285 = vunpack.c.l.b16 %v216
      %v286 = vunpack.c.l.b16 %v217
      %v287 = vunpack.c.l.b16 %v218
      %v288 = vunpack.c.l.b16 %v219
      %v289 = vunpack.c.l.b16 %v220
      %v290 = vunpack.c.l.b16 %v221
      %v291 = vunpack.c.l.b16 %v222
      %v292 = vunpack.c.l.b16 %v223
      %v293 = vunpack.c.l.b16 %v224
      %v294 = vunpack.c.l.b16 %v225
      %v295 = vunpack.c.l.b16 %v226
      %v296 = vunpack.c.l.b16 %v227
      %v297 = vunpack.c.l.b16 %v228
      %v298 = vunpack.c.l.b16 %v229
      %v299 = vunpack.c.l.b16 %v230
      %v300 = vpack.c.b16 %v269, %v268
      %v301 = vpack.c.b16 %v271, %v270
      %v302 = vpack.c.b16 %v273, %v272
      %v303 = vpack.c.b16 %v275, %v274
      %v304 = vpack.c.b16 %v277, %v276
      %v305 = vpack.c.b16 %v279, %v278
      %v306 = vpack.c.b16 %v281, %v280
      %v307 = vpack.c.b16 %v283, %v282
      %v308 = vpack.c.b16 %v285, %v284
      %v309 = vpack.c.b16 %v287, %v286
      %v310 = vpack.c.b16 %v289, %v288
      %v311 = vpack.c.b16 %v291, %v290
      %v312 = vpack.c.b16 %v293, %v292
      %v313 = vpack.c.b16 %v295, %v294
      %v314 = vpack.c.b16 %v297, %v296
      %v315 = vpack.c.b16 %v299, %v298
      %vm316 = vcmask 64512
      %v318 = vsel %vm316, %v300, 0
      %v321 = vsel %vm316, %v301, 0
      %v324 = vsel %vm316, %v302, 0
      %v327 = vsel %vm316, %v303, 0
      %v330 = vsel %vm316, %v304, 0
      %v333 = vsel %vm316, %v305, 0
      %v336 = vsel %vm316, %v306, 0
      %v339 = vsel %vm316, %v307, 0
      %v342 = vsel %vm316, %v308, 0
      %v345 = vsel %vm316, %v309, 0
      %v348 = vsel %vm316, %v310, 0
      %v351 = vsel %vm316, %v311, 0
      %v354 = vsel %vm316, %v312, 0
      %v357 = vsel %vm316, %v313, 0
      %v360 = vsel %vm316, %v314, 0
      %v363 = vsel %vm316, %v315, 0
      %vm365 = vcmask 1043456
      %v367 = vsel %vm365, %v231, 0
      %369 = vmatpush.bf16.msra.mxu0 0
      %370 = vmatpush.bf16.msra.mxu0 0
      %371 = vmatpush.bf16.msra.mxu0 0
      %372 = vmatpush.bf16.msra.mxu0 0
      %373 = vmatpush.bf16.msra.mxu0 0
      %374 = vmatpush.bf16.msra.mxu0 0
      %375 = vmatpush.bf16.msra.mxu0 0
      %376 = vmatpush.bf16.msra.mxu0 %v367
      %377 = vmatmul.bf16.gmra.mxu0 %v318
      %v378 = vpop.f32.mrf.mxu0
      %v379 = vadd.f32 %v234, %v378
      %v380 = vpop.f32.mrf.mxu0
      %v381 = vadd.f32 %v234, %v380
      %382 = vmatmul.bf16.gmra.mxu0 %v321
      %v383 = vpop.f32.mrf.mxu0
      %v384 = vadd.f32 %v234, %v383
      %v385 = vpop.f32.mrf.mxu0
      %v386 = vadd.f32 %v234, %v385
      %387 = vmatmul.bf16.gmra.mxu0 %v324
      %v388 = vpop.f32.mrf.mxu0
      %v389 = vadd.f32 %v234, %v388
      %v390 = vpop.f32.mrf.mxu0
      %v391 = vadd.f32 %v234, %v390
      %392 = vmatmul.bf16.gmra.mxu0 %v327
      %v393 = vpop.f32.mrf.mxu0
      %v394 = vadd.f32 %v234, %v393
      %v395 = vpop.f32.mrf.mxu0
      %v396 = vadd.f32 %v234, %v395
      %397 = vmatmul.bf16.gmra.mxu0 %v330
      %v398 = vpop.f32.mrf.mxu0
      %v399 = vadd.f32 %v234, %v398
      %v400 = vpop.f32.mrf.mxu0
      %v401 = vadd.f32 %v234, %v400
      %402 = vmatmul.bf16.gmra.mxu0 %v333
      %v403 = vpop.f32.mrf.mxu0
      %v404 = vadd.f32 %v234, %v403
      %v405 = vpop.f32.mrf.mxu0
      %v406 = vadd.f32 %v234, %v405
      %407 = vmatmul.bf16.gmra.mxu0 %v336
      %v408 = vpop.f32.mrf.mxu0
      %v409 = vadd.f32 %v234, %v408
      %v410 = vpop.f32.mrf.mxu0
      %v411 = vadd.f32 %v234, %v410
      %412 = vmatmul.bf16.gmra.mxu0 %v339
      %v413 = vpop.f32.mrf.mxu0
      %v414 = vadd.f32 %v234, %v413
      %v415 = vpop.f32.mrf.mxu0
      %v416 = vadd.f32 %v234, %v415
      %417 = vmatmul.bf16.gmra.mxu0 %v342
      %v418 = vpop.f32.mrf.mxu0
      %v419 = vadd.f32 %v234, %v418
      %v420 = vpop.f32.mrf.mxu0
      %v421 = vadd.f32 %v234, %v420
      %422 = vmatmul.bf16.gmra.mxu0 %v345
      %v423 = vpop.f32.mrf.mxu0
      %v424 = vadd.f32 %v234, %v423
      %v425 = vpop.f32.mrf.mxu0
      %v426 = vadd.f32 %v234, %v425
      %427 = vmatmul.bf16.gmra.mxu0 %v348
      %v428 = vpop.f32.mrf.mxu0
      %v429 = vadd.f32 %v234, %v428
      %v430 = vpop.f32.mrf.mxu0
      %v431 = vadd.f32 %v234, %v430
      %432 = vmatmul.bf16.gmra.mxu0 %v351
      %v433 = vpop.f32.mrf.mxu0
      %v434 = vadd.f32 %v234, %v433
      %v435 = vpop.f32.mrf.mxu0
      %v436 = vadd.f32 %v234, %v435
      %437 = vmatmul.bf16.gmra.mxu0 %v354
      %v438 = vpop.f32.mrf.mxu0
      %v439 = vadd.f32 %v234, %v438
      %v440 = vpop.f32.mrf.mxu0
      %v441 = vadd.f32 %v234, %v440
      %442 = vmatmul.bf16.gmra.mxu0 %v357
      %v443 = vpop.f32.mrf.mxu0
      %v444 = vadd.f32 %v234, %v443
      %v445 = vpop.f32.mrf.mxu0
      %v446 = vadd.f32 %v234, %v445
      %447 = vmatmul.bf16.gmra.mxu0 %v360
      %v448 = vpop.f32.mrf.mxu0
      %v449 = vadd.f32 %v234, %v448
      %v450 = vpop.f32.mrf.mxu0
      %v451 = vadd.f32 %v234, %v450
      %452 = vmatmul.bf16.gmra.mxu0 %v363
      %v453 = vpop.f32.mrf.mxu0
      %v454 = vadd.f32 %v234, %v453
      %v455 = vpop.f32.mrf.mxu0
      %v456 = vadd.f32 %v234, %v455
      %457 = vdwg.mxu0
      %vm458 = vcmp.gt.f32.partialorder %v379, 0.0
      %vm459 = vcmp.gt.f32.partialorder %v381, 0.0
      %vm460 = vcmp.gt.f32.partialorder %v384, 0.0
      %vm461 = vcmp.gt.f32.partialorder %v386, 0.0
      %vm462 = vcmp.gt.f32.partialorder %v389, 0.0
      %vm463 = vcmp.gt.f32.partialorder %v391, 0.0
      %vm464 = vcmp.gt.f32.partialorder %v394, 0.0
      %vm465 = vcmp.gt.f32.partialorder %v396, 0.0
      %vm466 = vcmp.gt.f32.partialorder %v399, 0.0
      %vm467 = vcmp.gt.f32.partialorder %v401, 0.0
      %vm468 = vcmp.gt.f32.partialorder %v404, 0.0
      %vm469 = vcmp.gt.f32.partialorder %v406, 0.0
      %vm470 = vcmp.gt.f32.partialorder %v409, 0.0
      %vm471 = vcmp.gt.f32.partialorder %v411, 0.0
      %vm472 = vcmp.gt.f32.partialorder %v414, 0.0
      %vm473 = vcmp.gt.f32.partialorder %v416, 0.0
      %vm474 = vcmp.gt.f32.partialorder %v419, 0.0
      %vm475 = vcmp.gt.f32.partialorder %v421, 0.0
      %vm476 = vcmp.gt.f32.partialorder %v424, 0.0
      %vm477 = vcmp.gt.f32.partialorder %v426, 0.0
      %vm478 = vcmp.gt.f32.partialorder %v429, 0.0
      %vm479 = vcmp.gt.f32.partialorder %v431, 0.0
      %vm480 = vcmp.gt.f32.partialorder %v434, 0.0
      %vm481 = vcmp.gt.f32.partialorder %v436, 0.0
      %vm482 = vcmp.gt.f32.partialorder %v439, 0.0
      %vm483 = vcmp.gt.f32.partialorder %v441, 0.0
      %vm484 = vcmp.gt.f32.partialorder %v444, 0.0
      %vm485 = vcmp.gt.f32.partialorder %v446, 0.0
      %vm486 = vcmp.gt.f32.partialorder %v449, 0.0
      %vm487 = vcmp.gt.f32.partialorder %v451, 0.0
      %vm488 = vcmp.gt.f32.partialorder %v454, 0.0
      %vm489 = vcmp.gt.f32.partialorder %v456, 0.0
      %v490 = vmul.f32 %v379, 0.2
      %v491 = vmul.f32 %v381, 0.2
      %v492 = vmul.f32 %v384, 0.2
      %v493 = vmul.f32 %v386, 0.2
      %v494 = vmul.f32 %v389, 0.2
      %v495 = vmul.f32 %v391, 0.2
      %v496 = vmul.f32 %v394, 0.2
      %v497 = vmul.f32 %v396, 0.2
      %v498 = vmul.f32 %v399, 0.2
      %v499 = vmul.f32 %v401, 0.2
      %v500 = vmul.f32 %v404, 0.2
      %v501 = vmul.f32 %v406, 0.2
      %v502 = vmul.f32 %v409, 0.2
      %v503 = vmul.f32 %v411, 0.2
      %v504 = vmul.f32 %v414, 0.2
      %v505 = vmul.f32 %v416, 0.2
      %v506 = vmul.f32 %v419, 0.2
      %v507 = vmul.f32 %v421, 0.2
      %v508 = vmul.f32 %v424, 0.2
      %v509 = vmul.f32 %v426, 0.2
      %v510 = vmul.f32 %v429, 0.2
      %v511 = vmul.f32 %v431, 0.2
      %v512 = vmul.f32 %v434, 0.2
      %v513 = vmul.f32 %v436, 0.2
      %v514 = vmul.f32 %v439, 0.2
      %v515 = vmul.f32 %v441, 0.2
      %v516 = vmul.f32 %v444, 0.2
      %v517 = vmul.f32 %v446, 0.2
      %v518 = vmul.f32 %v449, 0.2
      %v519 = vmul.f32 %v451, 0.2
      %v520 = vmul.f32 %v454, 0.2
      %v521 = vmul.f32 %v456, 0.2
      %v522 = vsel %vm458, %v379, %v490
      %v523 = vsel %vm459, %v381, %v491
      %v524 = vsel %vm460, %v384, %v492
      %v525 = vsel %vm461, %v386, %v493
      %v526 = vsel %vm462, %v389, %v494
      %v527 = vsel %vm463, %v391, %v495
      %v528 = vsel %vm464, %v394, %v496
      %v529 = vsel %vm465, %v396, %v497
      %v530 = vsel %vm466, %v399, %v498
      %v531 = vsel %vm467, %v401, %v499
      %v532 = vsel %vm468, %v404, %v500
      %v533 = vsel %vm469, %v406, %v501
      %v534 = vsel %vm470, %v409, %v502
      %v535 = vsel %vm471, %v411, %v503
      %v536 = vsel %vm472, %v414, %v504
      %v537 = vsel %vm473, %v416, %v505
      %v538 = vsel %vm474, %v419, %v506
      %v539 = vsel %vm475, %v421, %v507
      %v540 = vsel %vm476, %v424, %v508
      %v541 = vsel %vm477, %v426, %v509
      %v542 = vsel %vm478, %v429, %v510
      %v543 = vsel %vm479, %v431, %v511
      %v544 = vsel %vm480, %v434, %v512
      %v545 = vsel %vm481, %v436, %v513
      %v546 = vsel %vm482, %v439, %v514
      %v547 = vsel %vm483, %v441, %v515
      %v548 = vsel %vm484, %v444, %v516
      %v549 = vsel %vm485, %v446, %v517
      %v550 = vsel %vm486, %v449, %v518
      %v551 = vsel %vm487, %v451, %v519
      %v552 = vsel %vm488, %v454, %v520
      %v553 = vsel %vm489, %v456, %v521
      %v554 = vpack.c.bf16 %v523, %v522
      %v555 = vpack.c.bf16 %v525, %v524
      %v556 = vpack.c.bf16 %v527, %v526
      %v557 = vpack.c.bf16 %v529, %v528
      %v558 = vpack.c.bf16 %v531, %v530
      %v559 = vpack.c.bf16 %v533, %v532
      %v560 = vpack.c.bf16 %v535, %v534
      %v561 = vpack.c.bf16 %v537, %v536
      %v562 = vpack.c.bf16 %v539, %v538
      %v563 = vpack.c.bf16 %v541, %v540
      %v564 = vpack.c.bf16 %v543, %v542
      %v565 = vpack.c.bf16 %v545, %v544
      %v566 = vpack.c.bf16 %v547, %v546
      %v567 = vpack.c.bf16 %v549, %v548
      %v568 = vpack.c.bf16 %v551, %v550
      %v569 = vpack.c.bf16 %v553, %v552
      %v570 = vld [vmem:[%s3] sm:$0xf]
      %v571 = vld [vmem:[%s3 + $0x4] sm:$0xf]
      %v572 = vld [vmem:[%s3 + $0x8] sm:$0xf]
      %v573 = vld [vmem:[%s3 + $0xc] sm:$0xf]
      %v574 = vld [vmem:[%s3 + $0x10] sm:$0xf]
      %v575 = vld [vmem:[%s3 + $0x14] sm:$0xf]
      %v576 = vld [vmem:[%s3 + $0x18] sm:$0xf]
      %v577 = vld [vmem:[%s3 + $0x1c] sm:$0xf]
      %v586 = vunpack.c.l.b16 %v570
      %v587 = vunpack.c.l.b16 %v571
      %v588 = vunpack.c.l.b16 %v572
      %v589 = vunpack.c.l.b16 %v573
      %v590 = vunpack.c.l.b16 %v574
      %v591 = vunpack.c.l.b16 %v575
      %v592 = vunpack.c.l.b16 %v576
      %v593 = vunpack.c.l.b16 %v577
      %v594 = vpack.c.b16 %v587, %v586
      %v595 = vpack.c.b16 %v589, %v588
      %v596 = vpack.c.b16 %v591, %v590
      %v597 = vpack.c.b16 %v593, %v592
      %vm602 = vcmask 523264
      %v604 = vsel %vm602, %v554, 0
      %v607 = vsel %vm602, %v555, 0
      %v610 = vsel %vm602, %v556, 0
      %v613 = vsel %vm602, %v557, 0
      %v616 = vsel %vm602, %v558, 0
      %v619 = vsel %vm602, %v559, 0
      %v622 = vsel %vm602, %v560, 0
      %v625 = vsel %vm602, %v561, 0
      %v628 = vsel %vm602, %v562, 0
      %v631 = vsel %vm602, %v563, 0
      %v634 = vsel %vm602, %v564, 0
      %v637 = vsel %vm602, %v565, 0
      %v640 = vsel %vm602, %v566, 0
      %v643 = vsel %vm602, %v567, 0
      %v646 = vsel %vm602, %v568, 0
      %v649 = vsel %vm602, %v569, 0
      %651 = vmatpush.bf16.msra.mxu0 0
      %652 = vmatpush.bf16.msra.mxu0 0
      %653 = vmatpush.bf16.msra.mxu0 0
      %654 = vmatpush.bf16.msra.mxu0 0
      %655 = vmatpush.bf16.msra.mxu0 %v597
      %656 = vmatpush.bf16.msra.mxu0 %v596
      %657 = vmatpush.bf16.msra.mxu0 %v595
      %658 = vmatpush.bf16.msra.mxu0 %v594
      %659 = vmatmul.bf16.gmra.mxu0 %v604
      %v660 = vpop.f32.mrf.mxu0
      %v661 = vadd.f32 0.0, %v660
      %v662 = vpop.f32.mrf.mxu0
      %v663 = vadd.f32 0.0, %v662
      %664 = vmatmul.bf16.gmra.mxu0 %v607
      %v665 = vpop.f32.mrf.mxu0
      %v666 = vadd.f32 0.0, %v665
      %v667 = vpop.f32.mrf.mxu0
      %v668 = vadd.f32 0.0, %v667
      %669 = vmatmul.bf16.gmra.mxu0 %v610
      %v670 = vpop.f32.mrf.mxu0
      %v671 = vadd.f32 0.0, %v670
      %v672 = vpop.f32.mrf.mxu0
      %v673 = vadd.f32 0.0, %v672
      %674 = vmatmul.bf16.gmra.mxu0 %v613
      %v675 = vpop.f32.mrf.mxu0
      %v676 = vadd.f32 0.0, %v675
      %v677 = vpop.f32.mrf.mxu0
      %v678 = vadd.f32 0.0, %v677
      %679 = vmatmul.bf16.gmra.mxu0 %v616
      %v680 = vpop.f32.mrf.mxu0
      %v681 = vadd.f32 0.0, %v680
      %v682 = vpop.f32.mrf.mxu0
      %v683 = vadd.f32 0.0, %v682
      %684 = vmatmul.bf16.gmra.mxu0 %v619
      %v685 = vpop.f32.mrf.mxu0
      %v686 = vadd.f32 0.0, %v685
      %v687 = vpop.f32.mrf.mxu0
      %v688 = vadd.f32 0.0, %v687
      %689 = vmatmul.bf16.gmra.mxu0 %v622
      %v690 = vpop.f32.mrf.mxu0
      %v691 = vadd.f32 0.0, %v690
      %v692 = vpop.f32.mrf.mxu0
      %v693 = vadd.f32 0.0, %v692
      %694 = vmatmul.bf16.gmra.mxu0 %v625
      %v695 = vpop.f32.mrf.mxu0
      %v696 = vadd.f32 0.0, %v695
      %v697 = vpop.f32.mrf.mxu0
      %v698 = vadd.f32 0.0, %v697
      %699 = vmatmul.bf16.gmra.mxu0 %v628
      %v700 = vpop.f32.mrf.mxu0
      %v701 = vadd.f32 0.0, %v700
      %v702 = vpop.f32.mrf.mxu0
      %v703 = vadd.f32 0.0, %v702
      %704 = vmatmul.bf16.gmra.mxu0 %v631
      %v705 = vpop.f32.mrf.mxu0
      %v706 = vadd.f32 0.0, %v705
      %v707 = vpop.f32.mrf.mxu0
      %v708 = vadd.f32 0.0, %v707
      %709 = vmatmul.bf16.gmra.mxu0 %v634
      %v710 = vpop.f32.mrf.mxu0
      %v711 = vadd.f32 0.0, %v710
      %v712 = vpop.f32.mrf.mxu0
      %v713 = vadd.f32 0.0, %v712
      %714 = vmatmul.bf16.gmra.mxu0 %v637
      %v715 = vpop.f32.mrf.mxu0
      %v716 = vadd.f32 0.0, %v715
      %v717 = vpop.f32.mrf.mxu0
      %v718 = vadd.f32 0.0, %v717
      %719 = vmatmul.bf16.gmra.mxu0 %v640
      %v720 = vpop.f32.mrf.mxu0
      %v721 = vadd.f32 0.0, %v720
      %v722 = vpop.f32.mrf.mxu0
      %v723 = vadd.f32 0.0, %v722
      %724 = vmatmul.bf16.gmra.mxu0 %v643
      %v725 = vpop.f32.mrf.mxu0
      %v726 = vadd.f32 0.0, %v725
      %v727 = vpop.f32.mrf.mxu0
      %v728 = vadd.f32 0.0, %v727
      %729 = vmatmul.bf16.gmra.mxu0 %v646
      %v730 = vpop.f32.mrf.mxu0
      %v731 = vadd.f32 0.0, %v730
      %v732 = vpop.f32.mrf.mxu0
      %v733 = vadd.f32 0.0, %v732
      %734 = vmatmul.bf16.gmra.mxu0 %v649
      %v735 = vpop.f32.mrf.mxu0
      %v736 = vadd.f32 0.0, %v735
      %v737 = vpop.f32.mrf.mxu0
      %v738 = vadd.f32 0.0, %v737
      %739 = vdwg.mxu0
      %v740 = vadd.f32 %v661, %v663
      %v741 = vadd.f32 %v740, %v666
      %v742 = vadd.f32 %v741, %v668
      %v743 = vadd.f32 %v742, %v671
      %v744 = vadd.f32 %v743, %v673
      %v745 = vadd.f32 %v744, %v676
      %v746 = vadd.f32 %v745, %v678
      %v747 = vadd.f32 %v746, %v681
      %v748 = vadd.f32 %v747, %v683
      %v749 = vadd.f32 %v748, %v686
      %v750 = vadd.f32 %v749, %v688
      %v751 = vadd.f32 %v750, %v691
      %v752 = vadd.f32 %v751, %v693
      %v753 = vadd.f32 %v752, %v696
      %v754 = vadd.f32 %v753, %v698
      %v755 = vadd.f32 %v754, %v701
      %v756 = vadd.f32 %v755, %v703
      %v757 = vadd.f32 %v756, %v706
      %v758 = vadd.f32 %v757, %v708
      %v759 = vadd.f32 %v758, %v711
      %v760 = vadd.f32 %v759, %v713
      %v761 = vadd.f32 %v760, %v716
      %v762 = vadd.f32 %v761, %v718
      %v763 = vadd.f32 %v762, %v721
      %v764 = vadd.f32 %v763, %v723
      %v765 = vadd.f32 %v764, %v726
      %v766 = vadd.f32 %v765, %v728
      %v767 = vadd.f32 %v766, %v731
      %v768 = vadd.f32 %v767, %v733
      %v769 = vadd.f32 %v768, %v736
      %v770 = vadd.f32 %v769, %v738
      %v771 = vrot.slane %v770, 4
      %v772 = vadd.f32 %v770, %v771
      %v773 = vrot.slane %v772, 2
      %v774 = vadd.f32 %v772, %v773
      %v775 = vrot.slane %v774, 1
      %v776 = vadd.f32 %v774, %v775
      %v777 = vmul.f32 %v661, %v661
      %v778 = vmul.f32 %v663, %v663
      %v779 = vmul.f32 %v666, %v666
      %v780 = vmul.f32 %v668, %v668
      %v781 = vmul.f32 %v671, %v671
      %v782 = vmul.f32 %v673, %v673
      %v783 = vmul.f32 %v676, %v676
      %v784 = vmul.f32 %v678, %v678
      %v785 = vmul.f32 %v681, %v681
      %v786 = vmul.f32 %v683, %v683
      %v787 = vmul.f32 %v686, %v686
      %v788 = vmul.f32 %v688, %v688
      %v789 = vmul.f32 %v691, %v691
      %v790 = vmul.f32 %v693, %v693
      %v791 = vmul.f32 %v696, %v696
      %v792 = vmul.f32 %v698, %v698
      %v793 = vmul.f32 %v701, %v701
      %v794 = vmul.f32 %v703, %v703
      %v795 = vmul.f32 %v706, %v706
      %v796 = vmul.f32 %v708, %v708
      %v797 = vmul.f32 %v711, %v711
      %v798 = vmul.f32 %v713, %v713
      %v799 = vmul.f32 %v716, %v716
      %v800 = vmul.f32 %v718, %v718
      %v801 = vmul.f32 %v721, %v721
      %v802 = vmul.f32 %v723, %v723
      %v803 = vmul.f32 %v726, %v726
      %v804 = vmul.f32 %v728, %v728
      %v805 = vmul.f32 %v731, %v731
      %v806 = vmul.f32 %v733, %v733
      %v807 = vmul.f32 %v736, %v736
      %v808 = vmul.f32 %v738, %v738
      %v809 = vadd.f32 %v777, %v778
      %v810 = vadd.f32 %v809, %v779
      %v811 = vadd.f32 %v810, %v780
      %v812 = vadd.f32 %v811, %v781
      %v813 = vadd.f32 %v812, %v782
      %v814 = vadd.f32 %v813, %v783
      %v815 = vadd.f32 %v814, %v784
      %v816 = vadd.f32 %v815, %v785
      %v817 = vadd.f32 %v816, %v786
      %v818 = vadd.f32 %v817, %v787
      %v819 = vadd.f32 %v818, %v788
      %v820 = vadd.f32 %v819, %v789
      %v821 = vadd.f32 %v820, %v790
      %v822 = vadd.f32 %v821, %v791
      %v823 = vadd.f32 %v822, %v792
      %v824 = vadd.f32 %v823, %v793
      %v825 = vadd.f32 %v824, %v794
      %v826 = vadd.f32 %v825, %v795
      %v827 = vadd.f32 %v826, %v796
      %v828 = vadd.f32 %v827, %v797
      %v829 = vadd.f32 %v828, %v798
      %v830 = vadd.f32 %v829, %v799
      %v831 = vadd.f32 %v830, %v800
      %v832 = vadd.f32 %v831, %v801
      %v833 = vadd.f32 %v832, %v802
      %v834 = vadd.f32 %v833, %v803
      %v835 = vadd.f32 %v834, %v804
      %v836 = vadd.f32 %v835, %v805
      %v837 = vadd.f32 %v836, %v806
      %v838 = vadd.f32 %v837, %v807
      %v839 = vadd.f32 %v838, %v808
      %v840 = vrot.slane %v839, 4
      %v841 = vadd.f32 %v839, %v840
      %v842 = vrot.slane %v841, 2
      %v843 = vadd.f32 %v841, %v842
      %v844 = vrot.slane %v843, 1
      %v845 = vadd.f32 %v843, %v844
      %v846 = vlaneseq
      %v847 = vshrl.u32 %v846, 7
      %vm848 = vcmp.eq.s32.totalorder %v847, 0
      %vm849 = vcmp.eq.s32.totalorder %v847, 1
      %v850 = vsel %vm849, %v845, 0.0
      %v851 = vsel %vm848, %v776, %v850
      %852 = vst [vmem:[%s197] sm:$0xff] %v851
      %p853 = scmp.lt.s32.totalorder %s15, 1
      %s854 = scalar_select %p853, %s15, 1
      %s855 = smul.addr %s854, 8
      %s856 = scalar_lea.vmem %s4, %s855
      // Predicated region
      $region37: #{_lambda_.2} parent=35 // pred_check
        %p857 = pneg %p122
      $region38: #{_lambda_.2} parent=35 // pred_check_branch
        %859 = sbr.rel (%p857) target = $region40
      $region39: #{_lambda_.2} parent=35 // pred_region
        _
      $region40: #{_lambda_.2} parent=35 // pred_fallthru
        _
    $region36: #{_lambda_.2} parent=5 // pred_fallthru
      _
    %p860 = scmp.le.s32.totalorder 2, %s10
    // Predicated region
    $region41: #{_lambda_.2} parent=5 // pred_check
      %p861 = pneg %p860
    $region42: #{_lambda_.2} parent=5 // pred_check_branch
      %863 = sbr.rel (%p861) target = $region44
    $region43: #{_lambda_.2} parent=5 // pred_region
      %s864 = ssub.s32 %s10, 2
      // Predicated region
      $region45: #{_lambda_.2} parent=43 // pred_check
        %p865 = pneg %p128
      $region46: #{_lambda_.2} parent=43 // pred_check_branch
        %867 = sbr.rel (%p865) target = $region48
      $region47: #{_lambda_.2} parent=43 // pred_region
        %p868 = scmp.lt.s32.totalorder %s16, 1
        %s869 = scalar_select %p868, %s16, 1
        %s870 = smul.addr %s869, 8
        %s871 = scalar_lea.vmem %s4, %s870
      $region48: #{_lambda_.2} parent=43 // pred_fallthru
        _
    $region44: #{_lambda_.2} parent=5 // pred_fallthru
      _
  $region6: #{_lambda_.2} parent=0 // loop_footer
    %s14 = sadd.s32 1, %s10
  $region7: #{_lambda_.2} parent=0 // loop_footer_branch
    %9 = sbr.rel target = $region3
  $region8: #{_lambda_.2} parent=0 // loop_exit
    _

// kernel: _lambda_.3
$region0: #{_lambda_.3}
  #allocation0 [shape = 'u32[]', space=smem, size = 0x4, offset = 0x4, fixed_abs, tag = 'smem constant byte address 0x4 - core index']
  #allocation1 [shape = 'u32[72,128]{1,0:T(1,128)}', space=vmem, size = 0x9000, scoped, tag = 'internal scratch']
  %s0 = inlined_call_operand.vmem [shape: bf16[512,8], index: 0, kind: input, shape index: {}]
  %s1 = inlined_call_operand.vmem [shape: bf16[8,64], index: 1, kind: input, shape index: {}]
  %s2 = inlined_call_operand.vmem [shape: f32[1,64], index: 2, kind: input, shape index: {}]
  %s3 = inlined_call_operand.vmem [shape: bf16[64,128], index: 3, kind: input, shape index: {}]
  %s4 = inlined_call_operand.vmem [shape: f32[1,128], index: 4, kind: input, shape index: {}]
  %s5 = inlined_call_operand.vmem [shape: f32[1,128], index: 5, kind: input, shape index: {}]
  %s6 = inlined_call_operand.vmem [shape: bf16[128,128], index: 6, kind: input, shape index: {}]
  %s7 = inlined_call_operand.vmem [shape: f32[512,128], index: 7, kind: output, shape index: {}]
  %s8 = sld [smem:[#allocation0]]
  $region61: #{_lambda_.3} parent=0
    _
  %s10 = ssub.s32 1, %s8
  %s11 = scalar_select 0, %s10, %s8
  loop: start=0, step=1, limit=4
  $region2: #{_lambda_.3} parent=0 // loop_pre_header
    _
  $region3: #{_lambda_.3} parent=0 // loop_header
    %s13 = sphi 0, %s17
    %p14 = scmp.ge.s32.totalorder %s13, 4
    %s23 = sphi 0, %s25
    %s26 = sphi 0, %s23
    %s27 = sphi 0, %s26
    %s43 = sphi 0, %s27
    %s47 = sphi 0, %s47
    %s49 = sphi 0, %s47
    %s50 = sphi 0, %s49
    %s64 = sphi 0, %s50
    %s68 = sphi 0, %s68
    %s70 = sphi 0, %s68
    %s71 = sphi 0, %s70
    %s85 = sphi 0, %s71
    %s89 = sphi 0, %s89
    %s91 = sphi 0, %s89
    %s92 = sphi 0, %s91
    %s106 = sphi 0, %s92
    %s110 = sphi 0, %s110
    %s112 = sphi 0, %s110
    %s113 = sphi 0, %s112
    %s127 = sphi 0, %s113
    %s131 = sphi 0, %s131
    %s133 = sphi 0, %s131
    %s134 = sphi 0, %s133
    %s148 = sphi 0, %s134
    %s152 = sphi 0, %s152
    %s154 = sphi 0, %s152
    %s155 = sphi 0, %s154
    %s169 = sphi 0, %s155
    %s175 = sphi 0, %s177
    %s178 = sphi 0, %s175
    %s179 = sphi 0, %s178
    %s195 = sphi 0, %s179
  $region4: #{_lambda_.3} parent=0 // loop_header_branch
    %16 = sbr.rel (%p14) target = $region8
  $region5: #{_lambda_.3} parent=0 // loop_body
    %s18 = ssub.s32 %s13, 1
    %s19 = ssub.s32 %s13, 2
    %s20 = sadd.s32 %s13, 1
    %s21 = ssub.s32 %s13, %s20
    %p22 = scmp.eq.s32.totalorder %s21, 0
    %s24 = sadd.s32 %s23, 1
    %s25 = scalar_select %p22, %s23, %s24
    %p28 = pneg %p22
    %p29 = scmp.eq.s32.totalorder %s13, 1
    %p30 = por %p28, %p29
    %p31 = scmp.ne.s32.totalorder %s23, %s26
    %p32 = scmp.eq.s32.totalorder %s13, 0
    %p33 = por %p31, %p32
    %p34 = scmp.ne.s32.totalorder %s23, %s26
    %p35 = scmp.eq.s32.totalorder %s18, 1
    %p36 = por %p34, %p35
    %p37 = scmp.ne.s32.totalorder %s26, %s27
    %p38 = scmp.eq.s32.totalorder %s18, 0
    %p39 = por %p37, %p38
    %p40 = scmp.ne.s32.totalorder %s26, %s27
    %p41 = scmp.eq.s32.totalorder %s19, 1
    %p42 = por %p40, %p41
    %p44 = scmp.ne.s32.totalorder %s27, %s43
    %p45 = scmp.eq.s32.totalorder %s19, 0
    %p46 = por %p44, %p45
    %s48 = sadd.s32 %s47, 1
    %p51 = scmp.eq.s32.totalorder %s13, 1
    %p52 = scmp.ne.s32.totalorder %s47, %s49
    %p53 = scmp.eq.s32.totalorder %s13, 0
    %p54 = por %p52, %p53
    %p55 = scmp.ne.s32.totalorder %s47, %s49
    %p56 = scmp.eq.s32.totalorder %s18, 1
    %p57 = por %p55, %p56
    %p58 = scmp.ne.s32.totalorder %s49, %s50
    %p59 = scmp.eq.s32.totalorder %s18, 0
    %p60 = por %p58, %p59
    %p61 = scmp.ne.s32.totalorder %s49, %s50
    %p62 = scmp.eq.s32.totalorder %s19, 1
    %p63 = por %p61, %p62
    %p65 = scmp.ne.s32.totalorder %s50, %s64
    %p66 = scmp.eq.s32.totalorder %s19, 0
    %p67 = por %p65, %p66
    %s69 = sadd.s32 %s68, 1
    %p72 = scmp.eq.s32.totalorder %s13, 1
    %p73 = scmp.ne.s32.totalorder %s68, %s70
    %p74 = scmp.eq.s32.totalorder %s13, 0
    %p75 = por %p73, %p74
    %p76 = scmp.ne.s32.totalorder %s68, %s70
    %p77 = scmp.eq.s32.totalorder %s18, 1
    %p78 = por %p76, %p77
    %p79 = scmp.ne.s32.totalorder %s70, %s71
    %p80 = scmp.eq.s32.totalorder %s18, 0
    %p81 = por %p79, %p80
    %p82 = scmp.ne.s32.totalorder %s70, %s71
    %p83 = scmp.eq.s32.totalorder %s19, 1
    %p84 = por %p82, %p83
    %p86 = scmp.ne.s32.totalorder %s71, %s85
    %p87 = scmp.eq.s32.totalorder %s19, 0
    %p88 = por %p86, %p87
    %s90 = sadd.s32 %s89, 1
    %p93 = scmp.eq.s32.totalorder %s13, 1
    %p94 = scmp.ne.s32.totalorder %s89, %s91
    %p95 = scmp.eq.s32.totalorder %s13, 0
    %p96 = por %p94, %p95
    %p97 = scmp.ne.s32.totalorder %s89, %s91
    %p98 = scmp.eq.s32.totalorder %s18, 1
    %p99 = por %p97, %p98
    %p100 = scmp.ne.s32.totalorder %s91, %s92
    %p101 = scmp.eq.s32.totalorder %s18, 0
    %p102 = por %p100, %p101
    %p103 = scmp.ne.s32.totalorder %s91, %s92
    %p104 = scmp.eq.s32.totalorder %s19, 1
    %p105 = por %p103, %p104
    %p107 = scmp.ne.s32.totalorder %s92, %s106
    %p108 = scmp.eq.s32.totalorder %s19, 0
    %p109 = por %p107, %p108
    %s111 = sadd.s32 %s110, 1
    %p114 = scmp.eq.s32.totalorder %s13, 1
    %p115 = scmp.ne.s32.totalorder %s110, %s112
    %p116 = scmp.eq.s32.totalorder %s13, 0
    %p117 = por %p115, %p116
    %p118 = scmp.ne.s32.totalorder %s110, %s112
    %p119 = scmp.eq.s32.totalorder %s18, 1
    %p120 = por %p118, %p119
    %p121 = scmp.ne.s32.totalorder %s112, %s113
    %p122 = scmp.eq.s32.totalorder %s18, 0
    %p123 = por %p121, %p122
    %p124 = scmp.ne.s32.totalorder %s112, %s113
    %p125 = scmp.eq.s32.totalorder %s19, 1
    %p126 = por %p124, %p125
    %p128 = scmp.ne.s32.totalorder %s113, %s127
    %p129 = scmp.eq.s32.totalorder %s19, 0
    %p130 = por %p128, %p129
    %s132 = sadd.s32 %s131, 1
    %p135 = scmp.eq.s32.totalorder %s13, 1
    %p136 = scmp.ne.s32.totalorder %s131, %s133
    %p137 = scmp.eq.s32.totalorder %s13, 0
    %p138 = por %p136, %p137
    %p139 = scmp.ne.s32.totalorder %s131, %s133
    %p140 = scmp.eq.s32.totalorder %s18, 1
    %p141 = por %p139, %p140
    %p142 = scmp.ne.s32.totalorder %s133, %s134
    %p143 = scmp.eq.s32.totalorder %s18, 0
    %p144 = por %p142, %p143
    %p145 = scmp.ne.s32.totalorder %s133, %s134
    %p146 = scmp.eq.s32.totalorder %s19, 1
    %p147 = por %p145, %p146
    %p149 = scmp.ne.s32.totalorder %s134, %s148
    %p150 = scmp.eq.s32.totalorder %s19, 0
    %p151 = por %p149, %p150
    %s153 = sadd.s32 %s152, 1
    %p156 = scmp.eq.s32.totalorder %s13, 1
    %p157 = scmp.ne.s32.totalorder %s152, %s154
    %p158 = scmp.eq.s32.totalorder %s13, 0
    %p159 = por %p157, %p158
    %p160 = scmp.ne.s32.totalorder %s152, %s154
    %p161 = scmp.eq.s32.totalorder %s18, 1
    %p162 = por %p160, %p161
    %p163 = scmp.ne.s32.totalorder %s154, %s155
    %p164 = scmp.eq.s32.totalorder %s18, 0
    %p165 = por %p163, %p164
    %p166 = scmp.ne.s32.totalorder %s154, %s155
    %p167 = scmp.eq.s32.totalorder %s19, 1
    %p168 = por %p166, %p167
    %p170 = scmp.ne.s32.totalorder %s155, %s169
    %p171 = scmp.eq.s32.totalorder %s19, 0
    %p172 = por %p170, %p171
    %s173 = ssub.s32 %s13, %s20
    %p174 = scmp.eq.s32.totalorder %s173, 0
    %s176 = sadd.s32 %s175, 1
    %s177 = scalar_select %p174, %s175, %s176
    %p180 = pneg %p174
    %p181 = scmp.eq.s32.totalorder %s13, 1
    %p182 = por %p180, %p181
    %p183 = scmp.ne.s32.totalorder %s175, %s178
    %p184 = scmp.eq.s32.totalorder %s13, 0
    %p185 = por %p183, %p184
    %p186 = scmp.ne.s32.totalorder %s175, %s178
    %p187 = scmp.eq.s32.totalorder %s18, 1
    %p188 = por %p186, %p187
    %p189 = scmp.ne.s32.totalorder %s178, %s179
    %p190 = scmp.eq.s32.totalorder %s18, 0
    %p191 = por %p189, %p190
    %p192 = scmp.ne.s32.totalorder %s178, %s179
    %p193 = scmp.eq.s32.totalorder %s19, 1
    %p194 = por %p192, %p193
    %p196 = scmp.ne.s32.totalorder %s179, %s195
    %p197 = scmp.eq.s32.totalorder %s19, 0
    %p198 = por %p196, %p197
    %p199 = scmp.le.s32.totalorder 1, %s13
    %p200 = scmp.lt.s32.totalorder %s13, 3
    %p201 = pnand %p199, %p200
    %p202 = pneg %p201
    // Predicated region
    $region9: #{_lambda_.3} parent=5 // pred_check
      _
    $region10: #{_lambda_.3} parent=5 // pred_check_branch
      %204 = sbr.rel (%p201) target = $region12
    $region11: #{_lambda_.3} parent=5 // pred_region
      %s205 = ssub.s32 %s13, 1
      // Predicated region
      $region13: #{_lambda_.3} parent=11 // pred_check
        %p206 = pneg %p60
      $region14: #{_lambda_.3} parent=11 // pred_check_branch
        %208 = sbr.rel (%p206) target = $region16
      $region15: #{_lambda_.3} parent=11 // pred_region
        _
      $region16: #{_lambda_.3} parent=11 // pred_fallthru
        _
      // Predicated region
      $region17: #{_lambda_.3} parent=11 // pred_check
        %p209 = pneg %p81
      $region18: #{_lambda_.3} parent=11 // pred_check_branch
        %211 = sbr.rel (%p209) target = $region20
      $region19: #{_lambda_.3} parent=11 // pred_region
        _
      $region20: #{_lambda_.3} parent=11 // pred_fallthru
        _
      // Predicated region
      $region21: #{_lambda_.3} parent=11 // pred_check
        %p212 = pneg %p102
      $region22: #{_lambda_.3} parent=11 // pred_check_branch
        %214 = sbr.rel (%p212) target = $region24
      $region23: #{_lambda_.3} parent=11 // pred_region
        _
      $region24: #{_lambda_.3} parent=11 // pred_fallthru
        _
      // Predicated region
      $region25: #{_lambda_.3} parent=11 // pred_check
        %p215 = pneg %p123
      $region26: #{_lambda_.3} parent=11 // pred_check_branch
        %217 = sbr.rel (%p215) target = $region28
      $region27: #{_lambda_.3} parent=11 // pred_region
        _
      $region28: #{_lambda_.3} parent=11 // pred_fallthru
        _
      // Predicated region
      $region29: #{_lambda_.3} parent=11 // pred_check
        %p218 = pneg %p144
      $region30: #{_lambda_.3} parent=11 // pred_check_branch
        %220 = sbr.rel (%p218) target = $region32
      $region31: #{_lambda_.3} parent=11 // pred_region
        _
      $region32: #{_lambda_.3} parent=11 // pred_fallthru
        _
      // Predicated region
      $region33: #{_lambda_.3} parent=11 // pred_check
        %p221 = pneg %p165
      $region34: #{_lambda_.3} parent=11 // pred_check_branch
        %223 = sbr.rel (%p221) target = $region36
      $region35: #{_lambda_.3} parent=11 // pred_region
        _
      $region36: #{_lambda_.3} parent=11 // pred_fallthru
        _
    $region12: #{_lambda_.3} parent=5 // pred_fallthru
      _
    %p224 = scmp.lt.s32.totalorder %s13, 2
    // Predicated region
    $region37: #{_lambda_.3} parent=5 // pred_check
      %p225 = pneg %p224
    $region38: #{_lambda_.3} parent=5 // pred_check_branch
      %227 = sbr.rel (%p225) target = $region40
    $region39: #{_lambda_.3} parent=5 // pred_region
      // Predicated region
      $region41: #{_lambda_.3} parent=39 // pred_check
        %p228 = pneg %p33
      $region42: #{_lambda_.3} parent=39 // pred_check_branch
        %230 = sbr.rel (%p228) target = $region44
      $region43: #{_lambda_.3} parent=39 // pred_region
        %s231 = smul.u32 32, %s13
        %p232 = scmp.lt.s32.totalorder %s231, 63
        %s233 = scalar_select %p232, %s231, 63
        %s234 = smul.addr %s233, 4
        %s235 = scalar_lea.vmem %s0, %s234
        %s236 = smul.u32 32, %s13
      $region44: #{_lambda_.3} parent=39 // pred_fallthru
        _
    $region40: #{_lambda_.3} parent=5 // pred_fallthru
      _
    %p237 = scmp.le.s32.totalorder 1, %s13
    %p238 = scmp.lt.s32.totalorder %s13, 3
    %p239 = pnand %p237, %p238
    %p240 = pneg %p239
    // Predicated region
    $region45: #{_lambda_.3} parent=5 // pred_check
      _
    $region46: #{_lambda_.3} parent=5 // pred_check_branch
      %242 = sbr.rel (%p239) target = $region48
    $region47: #{_lambda_.3} parent=5 // pred_region
      %s243 = ssub.s32 %s13, 1
      %s244 = smul.u32 32, %s18
      %p245 = scmp.lt.s32.totalorder %s244, 63
      %s246 = scalar_select %p245, %s244, 63
      %s247 = smul.addr %s246, 4
      %s248 = scalar_lea.vmem %s0, %s247
      %p249 = pneg %p39
      %p250 = pneg %p36
      %p251 = pneg %p60
      %p252 = pneg %p57
      %p253 = pneg %p81
      %p254 = pneg %p78
      %p255 = pneg %p102
      %p256 = pneg %p99
      %p257 = pneg %p123
      %p258 = pneg %p120
      %p259 = pneg %p144
      %p260 = pneg %p141
      %p261 = pneg %p165
      %p262 = pneg %p162
      %p263 = pneg %p191
      %p264 = pneg %p188
      %s265 = smul.u32 32, %s18
      %p266 = scmp.lt.s32.totalorder %s265, 63
      %s267 = scalar_select %p266, %s265, 63
      %s268 = smul.addr %s267, 8
      %s269 = scalar_lea.vmem %s7, %s268
      %s270 = smul.u32 32, %s18
      %p271 = scmp.lt.s32.totalorder %s270, 63
      %s272 = scalar_select %p271, %s270, 63
      %s273 = smul.addr %s272, 4
      %s274 = scalar_lea.vmem %s0, %s273
      %s275 = smul.u32 32, %s18
      %s276 = smul.u32 32, %s18
      %p277 = scmp.lt.s32.totalorder %s276, 63
      %s278 = scalar_select %p277, %s276, 63
      %s279 = smul.addr %s278, 8
      %s280 = scalar_lea.vmem %s7, %s279
      %s281 = smul.u32 32, %s18
      %v283 = vld [vmem:[%s274] sm:$0xf]
      %v284 = vld [vmem:[%s274 + $0x4] sm:$0xf]
      %v285 = vld [vmem:[%s274 + $0x8] sm:$0xf]
      %v286 = vld [vmem:[%s274 + $0xc] sm:$0xf]
      %v287 = vld [vmem:[%s274 + $0x10] sm:$0xf]
      %v288 = vld [vmem:[%s274 + $0x14] sm:$0xf]
      %v289 = vld [vmem:[%s274 + $0x18] sm:$0xf]
      %v290 = vld [vmem:[%s274 + $0x1c] sm:$0xf]
      %v291 = vld [vmem:[%s274 + $0x20] sm:$0xf]
      %v292 = vld [vmem:[%s274 + $0x24] sm:$0xf]
      %v293 = vld [vmem:[%s274 + $0x28] sm:$0xf]
      %v294 = vld [vmem:[%s274 + $0x2c] sm:$0xf]
      %v295 = vld [vmem:[%s274 + $0x30] sm:$0xf]
      %v296 = vld [vmem:[%s274 + $0x34] sm:$0xf]
      %v297 = vld [vmem:[%s274 + $0x38] sm:$0xf]
      %v298 = vld [vmem:[%s274 + $0x3c] sm:$0xf]
      %v299 = vld [vmem:[%s274 + $0x40] sm:$0xf]
      %v300 = vld [vmem:[%s274 + $0x44] sm:$0xf]
      %v301 = vld [vmem:[%s274 + $0x48] sm:$0xf]
      %v302 = vld [vmem:[%s274 + $0x4c] sm:$0xf]
      %v303 = vld [vmem:[%s274 + $0x50] sm:$0xf]
      %v304 = vld [vmem:[%s274 + $0x54] sm:$0xf]
      %v305 = vld [vmem:[%s274 + $0x58] sm:$0xf]
      %v306 = vld [vmem:[%s274 + $0x5c] sm:$0xf]
      %v307 = vld [vmem:[%s274 + $0x60] sm:$0xf]
      %v308 = vld [vmem:[%s274 + $0x64] sm:$0xf]
      %v309 = vld [vmem:[%s274 + $0x68] sm:$0xf]
      %v310 = vld [vmem:[%s274 + $0x6c] sm:$0xf]
      %v311 = vld [vmem:[%s274 + $0x70] sm:$0xf]
      %v312 = vld [vmem:[%s274 + $0x74] sm:$0xf]
      %v313 = vld [vmem:[%s274 + $0x78] sm:$0xf]
      %v314 = vld [vmem:[%s274 + $0x7c] sm:$0xf]
      %v315 = vld [vmem:[%s1] sm:$0xf]
      %v316 = vld [vmem:[%s2] sm:$0x1]
      %v318 = vperm.slane %v316, 0
      %v352 = vunpack.c.l.b16 %v283
      %v353 = vunpack.c.l.b16 %v284
      %v354 = vunpack.c.l.b16 %v285
      %v355 = vunpack.c.l.b16 %v286
      %v356 = vunpack.c.l.b16 %v287
      %v357 = vunpack.c.l.b16 %v288
      %v358 = vunpack.c.l.b16 %v289
      %v359 = vunpack.c.l.b16 %v290
      %v360 = vunpack.c.l.b16 %v291
      %v361 = vunpack.c.l.b16 %v292
      %v362 = vunpack.c.l.b16 %v293
      %v363 = vunpack.c.l.b16 %v294
      %v364 = vunpack.c.l.b16 %v295
      %v365 = vunpack.c.l.b16 %v296
      %v366 = vunpack.c.l.b16 %v297
      %v367 = vunpack.c.l.b16 %v298
      %v368 = vunpack.c.l.b16 %v299
      %v369 = vunpack.c.l.b16 %v300
      %v370 = vunpack.c.l.b16 %v301
      %v371 = vunpack.c.l.b16 %v302
      %v372 = vunpack.c.l.b16 %v303
      %v373 = vunpack.c.l.b16 %v304
      %v374 = vunpack.c.l.b16 %v305
      %v375 = vunpack.c.l.b16 %v306
      %v376 = vunpack.c.l.b16 %v307
      %v377 = vunpack.c.l.b16 %v308
      %v378 = vunpack.c.l.b16 %v309
      %v379 = vunpack.c.l.b16 %v310
      %v380 = vunpack.c.l.b16 %v311
      %v381 = vunpack.c.l.b16 %v312
      %v382 = vunpack.c.l.b16 %v313
      %v383 = vunpack.c.l.b16 %v314
      %v384 = vpack.c.b16 %v353, %v352
      %v385 = vpack.c.b16 %v355, %v354
      %v386 = vpack.c.b16 %v357, %v356
      %v387 = vpack.c.b16 %v359, %v358
      %v388 = vpack.c.b16 %v361, %v360
      %v389 = vpack.c.b16 %v363, %v362
      %v390 = vpack.c.b16 %v365, %v364
      %v391 = vpack.c.b16 %v367, %v366
      %v392 = vpack.c.b16 %v369, %v368
      %v393 = vpack.c.b16 %v371, %v370
      %v394 = vpack.c.b16 %v373, %v372
      %v395 = vpack.c.b16 %v375, %v374
      %v396 = vpack.c.b16 %v377, %v376
      %v397 = vpack.c.b16 %v379, %v378
      %v398 = vpack.c.b16 %v381, %v380
      %v399 = vpack.c.b16 %v383, %v382
      %vm400 = vcmask 64512
      %v402 = vsel %vm400, %v384, 0
      %v405 = vsel %vm400, %v385, 0
      %v408 = vsel %vm400, %v386, 0
      %v411 = vsel %vm400, %v387, 0
      %v414 = vsel %vm400, %v388, 0
      %v417 = vsel %vm400, %v389, 0
      %v420 = vsel %vm400, %v390, 0
      %v423 = vsel %vm400, %v391, 0
      %v426 = vsel %vm400, %v392, 0
      %v429 = vsel %vm400, %v393, 0
      %v432 = vsel %vm400, %v394, 0
      %v435 = vsel %vm400, %v395, 0
      %v438 = vsel %vm400, %v396, 0
      %v441 = vsel %vm400, %v397, 0
      %v444 = vsel %vm400, %v398, 0
      %v447 = vsel %vm400, %v399, 0
      %vm449 = vcmask 1043456
      %v451 = vsel %vm449, %v315, 0
      %453 = vmatpush.bf16.msra.mxu0 0
      %454 = vmatpush.bf16.msra.mxu0 0
      %455 = vmatpush.bf16.msra.mxu0 0
      %456 = vmatpush.bf16.msra.mxu0 0
      %457 = vmatpush.bf16.msra.mxu0 0
      %458 = vmatpush.bf16.msra.mxu0 0
      %459 = vmatpush.bf16.msra.mxu0 0
      %460 = vmatpush.bf16.msra.mxu0 %v451
      %461 = vmatmul.bf16.gmra.mxu0 %v402
      %v462 = vpop.f32.mrf.mxu0
      %v463 = vadd.f32 %v318, %v462
      %v464 = vpop.f32.mrf.mxu0
      %v465 = vadd.f32 %v318, %v464
      %466 = vmatmul.bf16.gmra.mxu0 %v405
      %v467 = vpop.f32.mrf.mxu0
      %v468 = vadd.f32 %v318, %v467
      %v469 = vpop.f32.mrf.mxu0
      %v470 = vadd.f32 %v318, %v469
      %471 = vmatmul.bf16.gmra.mxu0 %v408
      %v472 = vpop.f32.mrf.mxu0
      %v473 = vadd.f32 %v318, %v472
      %v474 = vpop.f32.mrf.mxu0
      %v475 = vadd.f32 %v318, %v474
      %476 = vmatmul.bf16.gmra.mxu0 %v411
      %v477 = vpop.f32.mrf.mxu0
      %v478 = vadd.f32 %v318, %v477
      %v479 = vpop.f32.mrf.mxu0
      %v480 = vadd.f32 %v318, %v479
      %481 = vmatmul.bf16.gmra.mxu0 %v414
      %v482 = vpop.f32.mrf.mxu0
      %v483 = vadd.f32 %v318, %v482
      %v484 = vpop.f32.mrf.mxu0
      %v485 = vadd.f32 %v318, %v484
      %486 = vmatmul.bf16.gmra.mxu0 %v417
      %v487 = vpop.f32.mrf.mxu0
      %v488 = vadd.f32 %v318, %v487
      %v489 = vpop.f32.mrf.mxu0
      %v490 = vadd.f32 %v318, %v489
      %491 = vmatmul.bf16.gmra.mxu0 %v420
      %v492 = vpop.f32.mrf.mxu0
      %v493 = vadd.f32 %v318, %v492
      %v494 = vpop.f32.mrf.mxu0
      %v495 = vadd.f32 %v318, %v494
      %496 = vmatmul.bf16.gmra.mxu0 %v423
      %v497 = vpop.f32.mrf.mxu0
      %v498 = vadd.f32 %v318, %v497
      %v499 = vpop.f32.mrf.mxu0
      %v500 = vadd.f32 %v318, %v499
      %501 = vmatmul.bf16.gmra.mxu0 %v426
      %v502 = vpop.f32.mrf.mxu0
      %v503 = vadd.f32 %v318, %v502
      %v504 = vpop.f32.mrf.mxu0
      %v505 = vadd.f32 %v318, %v504
      %506 = vmatmul.bf16.gmra.mxu0 %v429
      %v507 = vpop.f32.mrf.mxu0
      %v508 = vadd.f32 %v318, %v507
      %v509 = vpop.f32.mrf.mxu0
      %v510 = vadd.f32 %v318, %v509
      %511 = vmatmul.bf16.gmra.mxu0 %v432
      %v512 = vpop.f32.mrf.mxu0
      %v513 = vadd.f32 %v318, %v512
      %v514 = vpop.f32.mrf.mxu0
      %v515 = vadd.f32 %v318, %v514
      %516 = vmatmul.bf16.gmra.mxu0 %v435
      %v517 = vpop.f32.mrf.mxu0
      %v518 = vadd.f32 %v318, %v517
      %v519 = vpop.f32.mrf.mxu0
      %v520 = vadd.f32 %v318, %v519
      %521 = vmatmul.bf16.gmra.mxu0 %v438
      %v522 = vpop.f32.mrf.mxu0
      %v523 = vadd.f32 %v318, %v522
      %v524 = vpop.f32.mrf.mxu0
      %v525 = vadd.f32 %v318, %v524
      %526 = vmatmul.bf16.gmra.mxu0 %v441
      %v527 = vpop.f32.mrf.mxu0
      %v528 = vadd.f32 %v318, %v527
      %v529 = vpop.f32.mrf.mxu0
      %v530 = vadd.f32 %v318, %v529
      %531 = vmatmul.bf16.gmra.mxu0 %v444
      %v532 = vpop.f32.mrf.mxu0
      %v533 = vadd.f32 %v318, %v532
      %v534 = vpop.f32.mrf.mxu0
      %v535 = vadd.f32 %v318, %v534
      %536 = vmatmul.bf16.gmra.mxu0 %v447
      %v537 = vpop.f32.mrf.mxu0
      %v538 = vadd.f32 %v318, %v537
      %v539 = vpop.f32.mrf.mxu0
      %v540 = vadd.f32 %v318, %v539
      %541 = vdwg.mxu0
      %vm542 = vcmp.gt.f32.partialorder %v463, 0.0
      %vm543 = vcmp.gt.f32.partialorder %v465, 0.0
      %vm544 = vcmp.gt.f32.partialorder %v468, 0.0
      %vm545 = vcmp.gt.f32.partialorder %v470, 0.0
      %vm546 = vcmp.gt.f32.partialorder %v473, 0.0
      %vm547 = vcmp.gt.f32.partialorder %v475, 0.0
      %vm548 = vcmp.gt.f32.partialorder %v478, 0.0
      %vm549 = vcmp.gt.f32.partialorder %v480, 0.0
      %vm550 = vcmp.gt.f32.partialorder %v483, 0.0
      %vm551 = vcmp.gt.f32.partialorder %v485, 0.0
      %vm552 = vcmp.gt.f32.partialorder %v488, 0.0
      %vm553 = vcmp.gt.f32.partialorder %v490, 0.0
      %vm554 = vcmp.gt.f32.partialorder %v493, 0.0
      %vm555 = vcmp.gt.f32.partialorder %v495, 0.0
      %vm556 = vcmp.gt.f32.partialorder %v498, 0.0
      %vm557 = vcmp.gt.f32.partialorder %v500, 0.0
      %vm558 = vcmp.gt.f32.partialorder %v503, 0.0
      %vm559 = vcmp.gt.f32.partialorder %v505, 0.0
      %vm560 = vcmp.gt.f32.partialorder %v508, 0.0
      %vm561 = vcmp.gt.f32.partialorder %v510, 0.0
      %vm562 = vcmp.gt.f32.partialorder %v513, 0.0
      %vm563 = vcmp.gt.f32.partialorder %v515, 0.0
      %vm564 = vcmp.gt.f32.partialorder %v518, 0.0
      %vm565 = vcmp.gt.f32.partialorder %v520, 0.0
      %vm566 = vcmp.gt.f32.partialorder %v523, 0.0
      %vm567 = vcmp.gt.f32.partialorder %v525, 0.0
      %vm568 = vcmp.gt.f32.partialorder %v528, 0.0
      %vm569 = vcmp.gt.f32.partialorder %v530, 0.0
      %vm570 = vcmp.gt.f32.partialorder %v533, 0.0
      %vm571 = vcmp.gt.f32.partialorder %v535, 0.0
      %vm572 = vcmp.gt.f32.partialorder %v538, 0.0
      %vm573 = vcmp.gt.f32.partialorder %v540, 0.0
      %v574 = vmul.f32 %v463, 0.2
      %v575 = vmul.f32 %v465, 0.2
      %v576 = vmul.f32 %v468, 0.2
      %v577 = vmul.f32 %v470, 0.2
      %v578 = vmul.f32 %v473, 0.2
      %v579 = vmul.f32 %v475, 0.2
      %v580 = vmul.f32 %v478, 0.2
      %v581 = vmul.f32 %v480, 0.2
      %v582 = vmul.f32 %v483, 0.2
      %v583 = vmul.f32 %v485, 0.2
      %v584 = vmul.f32 %v488, 0.2
      %v585 = vmul.f32 %v490, 0.2
      %v586 = vmul.f32 %v493, 0.2
      %v587 = vmul.f32 %v495, 0.2
      %v588 = vmul.f32 %v498, 0.2
      %v589 = vmul.f32 %v500, 0.2
      %v590 = vmul.f32 %v503, 0.2
      %v591 = vmul.f32 %v505, 0.2
      %v592 = vmul.f32 %v508, 0.2
      %v593 = vmul.f32 %v510, 0.2
      %v594 = vmul.f32 %v513, 0.2
      %v595 = vmul.f32 %v515, 0.2
      %v596 = vmul.f32 %v518, 0.2
      %v597 = vmul.f32 %v520, 0.2
      %v598 = vmul.f32 %v523, 0.2
      %v599 = vmul.f32 %v525, 0.2
      %v600 = vmul.f32 %v528, 0.2
      %v601 = vmul.f32 %v530, 0.2
      %v602 = vmul.f32 %v533, 0.2
      %v603 = vmul.f32 %v535, 0.2
      %v604 = vmul.f32 %v538, 0.2
      %v605 = vmul.f32 %v540, 0.2
      %v606 = vsel %vm542, %v463, %v574
      %v607 = vsel %vm543, %v465, %v575
      %v608 = vsel %vm544, %v468, %v576
      %v609 = vsel %vm545, %v470, %v577
      %v610 = vsel %vm546, %v473, %v578
      %v611 = vsel %vm547, %v475, %v579
      %v612 = vsel %vm548, %v478, %v580
      %v613 = vsel %vm549, %v480, %v581
      %v614 = vsel %vm550, %v483, %v582
      %v615 = vsel %vm551, %v485, %v583
      %v616 = vsel %vm552, %v488, %v584
      %v617 = vsel %vm553, %v490, %v585
      %v618 = vsel %vm554, %v493, %v586
      %v619 = vsel %vm555, %v495, %v587
      %v620 = vsel %vm556, %v498, %v588
      %v621 = vsel %vm557, %v500, %v589
      %v622 = vsel %vm558, %v503, %v590
      %v623 = vsel %vm559, %v505, %v591
      %v624 = vsel %vm560, %v508, %v592
      %v625 = vsel %vm561, %v510, %v593
      %v626 = vsel %vm562, %v513, %v594
      %v627 = vsel %vm563, %v515, %v595
      %v628 = vsel %vm564, %v518, %v596
      %v629 = vsel %vm565, %v520, %v597
      %v630 = vsel %vm566, %v523, %v598
      %v631 = vsel %vm567, %v525, %v599
      %v632 = vsel %vm568, %v528, %v600
      %v633 = vsel %vm569, %v530, %v601
      %v634 = vsel %vm570, %v533, %v602
      %v635 = vsel %vm571, %v535, %v603
      %v636 = vsel %vm572, %v538, %v604
      %v637 = vsel %vm573, %v540, %v605
      %v638 = vpack.c.bf16 %v607, %v606
      %v639 = vpack.c.bf16 %v609, %v608
      %v640 = vpack.c.bf16 %v611, %v610
      %v641 = vpack.c.bf16 %v613, %v612
      %v642 = vpack.c.bf16 %v615, %v614
      %v643 = vpack.c.bf16 %v617, %v616
      %v644 = vpack.c.bf16 %v619, %v618
      %v645 = vpack.c.bf16 %v621, %v620
      %v646 = vpack.c.bf16 %v623, %v622
      %v647 = vpack.c.bf16 %v625, %v624
      %v648 = vpack.c.bf16 %v627, %v626
      %v649 = vpack.c.bf16 %v629, %v628
      %v650 = vpack.c.bf16 %v631, %v630
      %v651 = vpack.c.bf16 %v633, %v632
      %v652 = vpack.c.bf16 %v635, %v634
      %v653 = vpack.c.bf16 %v637, %v636
      %v654 = vld [vmem:[%s3] sm:$0xf]
      %v655 = vld [vmem:[%s3 + $0x4] sm:$0xf]
      %v656 = vld [vmem:[%s3 + $0x8] sm:$0xf]
      %v657 = vld [vmem:[%s3 + $0xc] sm:$0xf]
      %v658 = vld [vmem:[%s3 + $0x10] sm:$0xf]
      %v659 = vld [vmem:[%s3 + $0x14] sm:$0xf]
      %v660 = vld [vmem:[%s3 + $0x18] sm:$0xf]
      %v661 = vld [vmem:[%s3 + $0x1c] sm:$0xf]
      %v670 = vunpack.c.l.b16 %v654
      %v671 = vunpack.c.l.b16 %v655
      %v672 = vunpack.c.l.b16 %v656
      %v673 = vunpack.c.l.b16 %v657
      %v674 = vunpack.c.l.b16 %v658
      %v675 = vunpack.c.l.b16 %v659
      %v676 = vunpack.c.l.b16 %v660
      %v677 = vunpack.c.l.b16 %v661
      %v678 = vpack.c.b16 %v671, %v670
      %v679 = vpack.c.b16 %v673, %v672
      %v680 = vpack.c.b16 %v675, %v674
      %v681 = vpack.c.b16 %v677, %v676
      %vm686 = vcmask 523264
      %v688 = vsel %vm686, %v638, 0
      %v691 = vsel %vm686, %v639, 0
      %v694 = vsel %vm686, %v640, 0
      %v697 = vsel %vm686, %v641, 0
      %v700 = vsel %vm686, %v642, 0
      %v703 = vsel %vm686, %v643, 0
      %v706 = vsel %vm686, %v644, 0
      %v709 = vsel %vm686, %v645, 0
      %v712 = vsel %vm686, %v646, 0
      %v715 = vsel %vm686, %v647, 0
      %v718 = vsel %vm686, %v648, 0
      %v721 = vsel %vm686, %v649, 0
      %v724 = vsel %vm686, %v650, 0
      %v727 = vsel %vm686, %v651, 0
      %v730 = vsel %vm686, %v652, 0
      %v733 = vsel %vm686, %v653, 0
      %735 = vmatpush.bf16.msra.mxu0 0
      %736 = vmatpush.bf16.msra.mxu0 0
      %737 = vmatpush.bf16.msra.mxu0 0
      %738 = vmatpush.bf16.msra.mxu0 0
      %739 = vmatpush.bf16.msra.mxu0 %v681
      %740 = vmatpush.bf16.msra.mxu0 %v680
      %741 = vmatpush.bf16.msra.mxu0 %v679
      %742 = vmatpush.bf16.msra.mxu0 %v678
      %743 = vmatmul.bf16.gmra.mxu0 %v688
      %v744 = vpop.f32.mrf.mxu0
      %v745 = vadd.f32 0.0, %v744
      %v746 = vpop.f32.mrf.mxu0
      %v747 = vadd.f32 0.0, %v746
      %748 = vmatmul.bf16.gmra.mxu0 %v691
      %v749 = vpop.f32.mrf.mxu0
      %v750 = vadd.f32 0.0, %v749
      %v751 = vpop.f32.mrf.mxu0
      %v752 = vadd.f32 0.0, %v751
      %753 = vmatmul.bf16.gmra.mxu0 %v694
      %v754 = vpop.f32.mrf.mxu0
      %v755 = vadd.f32 0.0, %v754
      %v756 = vpop.f32.mrf.mxu0
      %v757 = vadd.f32 0.0, %v756
      %758 = vmatmul.bf16.gmra.mxu0 %v697
      %v759 = vpop.f32.mrf.mxu0
      %v760 = vadd.f32 0.0, %v759
      %v761 = vpop.f32.mrf.mxu0
      %v762 = vadd.f32 0.0, %v761
      %763 = vmatmul.bf16.gmra.mxu0 %v700
      %v764 = vpop.f32.mrf.mxu0
      %v765 = vadd.f32 0.0, %v764
      %v766 = vpop.f32.mrf.mxu0
      %v767 = vadd.f32 0.0, %v766
      %768 = vmatmul.bf16.gmra.mxu0 %v703
      %v769 = vpop.f32.mrf.mxu0
      %v770 = vadd.f32 0.0, %v769
      %v771 = vpop.f32.mrf.mxu0
      %v772 = vadd.f32 0.0, %v771
      %773 = vmatmul.bf16.gmra.mxu0 %v706
      %v774 = vpop.f32.mrf.mxu0
      %v775 = vadd.f32 0.0, %v774
      %v776 = vpop.f32.mrf.mxu0
      %v777 = vadd.f32 0.0, %v776
      %778 = vmatmul.bf16.gmra.mxu0 %v709
      %v779 = vpop.f32.mrf.mxu0
      %v780 = vadd.f32 0.0, %v779
      %v781 = vpop.f32.mrf.mxu0
      %v782 = vadd.f32 0.0, %v781
      %783 = vmatmul.bf16.gmra.mxu0 %v712
      %v784 = vpop.f32.mrf.mxu0
      %v785 = vadd.f32 0.0, %v784
      %v786 = vpop.f32.mrf.mxu0
      %v787 = vadd.f32 0.0, %v786
      %788 = vmatmul.bf16.gmra.mxu0 %v715
      %v789 = vpop.f32.mrf.mxu0
      %v790 = vadd.f32 0.0, %v789
      %v791 = vpop.f32.mrf.mxu0
      %v792 = vadd.f32 0.0, %v791
      %793 = vmatmul.bf16.gmra.mxu0 %v718
      %v794 = vpop.f32.mrf.mxu0
      %v795 = vadd.f32 0.0, %v794
      %v796 = vpop.f32.mrf.mxu0
      %v797 = vadd.f32 0.0, %v796
      %798 = vmatmul.bf16.gmra.mxu0 %v721
      %v799 = vpop.f32.mrf.mxu0
      %v800 = vadd.f32 0.0, %v799
      %v801 = vpop.f32.mrf.mxu0
      %v802 = vadd.f32 0.0, %v801
      %803 = vmatmul.bf16.gmra.mxu0 %v724
      %v804 = vpop.f32.mrf.mxu0
      %v805 = vadd.f32 0.0, %v804
      %v806 = vpop.f32.mrf.mxu0
      %v807 = vadd.f32 0.0, %v806
      %808 = vmatmul.bf16.gmra.mxu0 %v727
      %v809 = vpop.f32.mrf.mxu0
      %v810 = vadd.f32 0.0, %v809
      %v811 = vpop.f32.mrf.mxu0
      %v812 = vadd.f32 0.0, %v811
      %813 = vmatmul.bf16.gmra.mxu0 %v730
      %v814 = vpop.f32.mrf.mxu0
      %v815 = vadd.f32 0.0, %v814
      %v816 = vpop.f32.mrf.mxu0
      %v817 = vadd.f32 0.0, %v816
      %818 = vmatmul.bf16.gmra.mxu0 %v733
      %v819 = vpop.f32.mrf.mxu0
      %v820 = vadd.f32 0.0, %v819
      %v821 = vpop.f32.mrf.mxu0
      %v822 = vadd.f32 0.0, %v821
      %823 = vdwg.mxu0
      %v824 = vld [vmem:[%s4] sm:$0x1]
      %v826 = vperm.slane %v824, 0
      %v828 = vmul.f32 %v745, %v826
      %v829 = vmul.f32 %v747, %v826
      %v830 = vmul.f32 %v750, %v826
      %v831 = vmul.f32 %v752, %v826
      %v832 = vmul.f32 %v755, %v826
      %v833 = vmul.f32 %v757, %v826
      %v834 = vmul.f32 %v760, %v826
      %v835 = vmul.f32 %v762, %v826
      %v836 = vmul.f32 %v765, %v826
      %v837 = vmul.f32 %v767, %v826
      %v838 = vmul.f32 %v770, %v826
      %v839 = vmul.f32 %v772, %v826
      %v840 = vmul.f32 %v775, %v826
      %v841 = vmul.f32 %v777, %v826
      %v842 = vmul.f32 %v780, %v826
      %v843 = vmul.f32 %v782, %v826
      %v844 = vmul.f32 %v785, %v826
      %v845 = vmul.f32 %v787, %v826
      %v846 = vmul.f32 %v790, %v826
      %v847 = vmul.f32 %v792, %v826
      %v848 = vmul.f32 %v795, %v826
      %v849 = vmul.f32 %v797, %v826
      %v850 = vmul.f32 %v800, %v826
      %v851 = vmul.f32 %v802, %v826
      %v852 = vmul.f32 %v805, %v826
      %v853 = vmul.f32 %v807, %v826
      %v854 = vmul.f32 %v810, %v826
      %v855 = vmul.f32 %v812, %v826
      %v856 = vmul.f32 %v815, %v826
      %v857 = vmul.f32 %v817, %v826
      %v858 = vmul.f32 %v820, %v826
      %v859 = vmul.f32 %v822, %v826
      %v860 = vld [vmem:[%s5] sm:$0x1]
      %v862 = vperm.slane %v860, 0
      %v864 = vadd.f32 %v828, %v862
      %v865 = vadd.f32 %v829, %v862
      %v866 = vadd.f32 %v830, %v862
      %v867 = vadd.f32 %v831, %v862
      %v868 = vadd.f32 %v832, %v862
      %v869 = vadd.f32 %v833, %v862
      %v870 = vadd.f32 %v834, %v862
      %v871 = vadd.f32 %v835, %v862
      %v872 = vadd.f32 %v836, %v862
      %v873 = vadd.f32 %v837, %v862
      %v874 = vadd.f32 %v838, %v862
      %v875 = vadd.f32 %v839, %v862
      %v876 = vadd.f32 %v840, %v862
      %v877 = vadd.f32 %v841, %v862
      %v878 = vadd.f32 %v842, %v862
      %v879 = vadd.f32 %v843, %v862
      %v880 = vadd.f32 %v844, %v862
      %v881 = vadd.f32 %v845, %v862
      %v882 = vadd.f32 %v846, %v862
      %v883 = vadd.f32 %v847, %v862
      %v884 = vadd.f32 %v848, %v862
      %v885 = vadd.f32 %v849, %v862
      %v886 = vadd.f32 %v850, %v862
      %v887 = vadd.f32 %v851, %v862
      %v888 = vadd.f32 %v852, %v862
      %v889 = vadd.f32 %v853, %v862
      %v890 = vadd.f32 %v854, %v862
      %v891 = vadd.f32 %v855, %v862
      %v892 = vadd.f32 %v856, %v862
      %v893 = vadd.f32 %v857, %v862
      %v894 = vadd.f32 %v858, %v862
      %v895 = vadd.f32 %v859, %v862
      %vm896 = vcmp.gt.f32.partialorder %v864, 0.0
      %vm897 = vcmp.gt.f32.partialorder %v865, 0.0
      %vm898 = vcmp.gt.f32.partialorder %v866, 0.0
      %vm899 = vcmp.gt.f32.partialorder %v867, 0.0
      %vm900 = vcmp.gt.f32.partialorder %v868, 0.0
      %vm901 = vcmp.gt.f32.partialorder %v869, 0.0
      %vm902 = vcmp.gt.f32.partialorder %v870, 0.0
      %vm903 = vcmp.gt.f32.partialorder %v871, 0.0
      %vm904 = vcmp.gt.f32.partialorder %v872, 0.0
      %vm905 = vcmp.gt.f32.partialorder %v873, 0.0
      %vm906 = vcmp.gt.f32.partialorder %v874, 0.0
      %vm907 = vcmp.gt.f32.partialorder %v875, 0.0
      %vm908 = vcmp.gt.f32.partialorder %v876, 0.0
      %vm909 = vcmp.gt.f32.partialorder %v877, 0.0
      %vm910 = vcmp.gt.f32.partialorder %v878, 0.0
      %vm911 = vcmp.gt.f32.partialorder %v879, 0.0
      %vm912 = vcmp.gt.f32.partialorder %v880, 0.0
      %vm913 = vcmp.gt.f32.partialorder %v881, 0.0
      %vm914 = vcmp.gt.f32.partialorder %v882, 0.0
      %vm915 = vcmp.gt.f32.partialorder %v883, 0.0
      %vm916 = vcmp.gt.f32.partialorder %v884, 0.0
      %vm917 = vcmp.gt.f32.partialorder %v885, 0.0
      %vm918 = vcmp.gt.f32.partialorder %v886, 0.0
      %vm919 = vcmp.gt.f32.partialorder %v887, 0.0
      %vm920 = vcmp.gt.f32.partialorder %v888, 0.0
      %vm921 = vcmp.gt.f32.partialorder %v889, 0.0
      %vm922 = vcmp.gt.f32.partialorder %v890, 0.0
      %vm923 = vcmp.gt.f32.partialorder %v891, 0.0
      %vm924 = vcmp.gt.f32.partialorder %v892, 0.0
      %vm925 = vcmp.gt.f32.partialorder %v893, 0.0
      %vm926 = vcmp.gt.f32.partialorder %v894, 0.0
      %vm927 = vcmp.gt.f32.partialorder %v895, 0.0
      %v928 = vmul.f32 %v864, 0.2
      %v929 = vmul.f32 %v865, 0.2
      %v930 = vmul.f32 %v866, 0.2
      %v931 = vmul.f32 %v867, 0.2
      %v932 = vmul.f32 %v868, 0.2
      %v933 = vmul.f32 %v869, 0.2
      %v934 = vmul.f32 %v870, 0.2
      %v935 = vmul.f32 %v871, 0.2
      %v936 = vmul.f32 %v872, 0.2
      %v937 = vmul.f32 %v873, 0.2
      %v938 = vmul.f32 %v874, 0.2
      %v939 = vmul.f32 %v875, 0.2
      %v940 = vmul.f32 %v876, 0.2
      %v941 = vmul.f32 %v877, 0.2
      %v942 = vmul.f32 %v878, 0.2
      %v943 = vmul.f32 %v879, 0.2
      %v944 = vmul.f32 %v880, 0.2
      %v945 = vmul.f32 %v881, 0.2
      %v946 = vmul.f32 %v882, 0.2
      %v947 = vmul.f32 %v883, 0.2
      %v948 = vmul.f32 %v884, 0.2
      %v949 = vmul.f32 %v885, 0.2
      %v950 = vmul.f32 %v886, 0.2
      %v951 = vmul.f32 %v887, 0.2
      %v952 = vmul.f32 %v888, 0.2
      %v953 = vmul.f32 %v889, 0.2
      %v954 = vmul.f32 %v890, 0.2
      %v955 = vmul.f32 %v891, 0.2
      %v956 = vmul.f32 %v892, 0.2
      %v957 = vmul.f32 %v893, 0.2
      %v958 = vmul.f32 %v894, 0.2
      %v959 = vmul.f32 %v895, 0.2
      %v960 = vsel %vm896, %v864, %v928
      %v961 = vsel %vm897, %v865, %v929
      %v962 = vsel %vm898, %v866, %v930
      %v963 = vsel %vm899, %v867, %v931
      %v964 = vsel %vm900, %v868, %v932
      %v965 = vsel %vm901, %v869, %v933
      %v966 = vsel %vm902, %v870, %v934
      %v967 = vsel %vm903, %v871, %v935
      %v968 = vsel %vm904, %v872, %v936
      %v969 = vsel %vm905, %v873, %v937
      %v970 = vsel %vm906, %v874, %v938
      %v971 = vsel %vm907, %v875, %v939
      %v972 = vsel %vm908, %v876, %v940
      %v973 = vsel %vm909, %v877, %v941
      %v974 = vsel %vm910, %v878, %v942
      %v975 = vsel %vm911, %v879, %v943
      %v976 = vsel %vm912, %v880, %v944
      %v977 = vsel %vm913, %v881, %v945
      %v978 = vsel %vm914, %v882, %v946
      %v979 = vsel %vm915, %v883, %v947
      %v980 = vsel %vm916, %v884, %v948
      %v981 = vsel %vm917, %v885, %v949
      %v982 = vsel %vm918, %v886, %v950
      %v983 = vsel %vm919, %v887, %v951
      %v984 = vsel %vm920, %v888, %v952
      %v985 = vsel %vm921, %v889, %v953
      %v986 = vsel %vm922, %v890, %v954
      %v987 = vsel %vm923, %v891, %v955
      %v988 = vsel %vm924, %v892, %v956
      %v989 = vsel %vm925, %v893, %v957
      %v990 = vsel %vm926, %v894, %v958
      %v991 = vsel %vm927, %v895, %v959
      %v992 = vpack.c.bf16 %v961, %v960
      %v993 = vpack.c.bf16 %v963, %v962
      %v994 = vpack.c.bf16 %v965, %v964
      %v995 = vpack.c.bf16 %v967, %v966
      %v996 = vpack.c.bf16 %v969, %v968
      %v997 = vpack.c.bf16 %v971, %v970
      %v998 = vpack.c.bf16 %v973, %v972
      %v999 = vpack.c.bf16 %v975, %v974
      %v1000 = vpack.c.bf16 %v977, %v976
      %v1001 = vpack.c.bf16 %v979, %v978
      %v1002 = vpack.c.bf16 %v981, %v980
      %v1003 = vpack.c.bf16 %v983, %v982
      %v1004 = vpack.c.bf16 %v985, %v984
      %v1005 = vpack.c.bf16 %v987, %v986
      %v1006 = vpack.c.bf16 %v989, %v988
      %v1007 = vpack.c.bf16 %v991, %v990
      %v1008 = vld [vmem:[%s6] sm:$0xf]
      %v1009 = vld [vmem:[%s6 + $0x4] sm:$0xf]
      %v1010 = vld [vmem:[%s6 + $0x8] sm:$0xf]
      %v1011 = vld [vmem:[%s6 + $0xc] sm:$0xf]
      %v1012 = vld [vmem:[%s6 + $0x10] sm:$0xf]
      %v1013 = vld [vmem:[%s6 + $0x14] sm:$0xf]
      %v1014 = vld [vmem:[%s6 + $0x18] sm:$0xf]
      %v1015 = vld [vmem:[%s6 + $0x1c] sm:$0xf]
      %v1016 = vld [vmem:[%s6 + $0x20] sm:$0xf]
      %v1017 = vld [vmem:[%s6 + $0x24] sm:$0xf]
      %v1018 = vld [vmem:[%s6 + $0x28] sm:$0xf]
      %v1019 = vld [vmem:[%s6 + $0x2c] sm:$0xf]
      %v1020 = vld [vmem:[%s6 + $0x30] sm:$0xf]
      %v1021 = vld [vmem:[%s6 + $0x34] sm:$0xf]
      %v1022 = vld [vmem:[%s6 + $0x38] sm:$0xf]
      %v1023 = vld [vmem:[%s6 + $0x3c] sm:$0xf]
      %v1040 = vunpack.c.l.b16 %v1008
      %v1041 = vunpack.c.l.b16 %v1009
      %v1042 = vunpack.c.l.b16 %v1010
      %v1043 = vunpack.c.l.b16 %v1011
      %v1044 = vunpack.c.l.b16 %v1012
      %v1045 = vunpack.c.l.b16 %v1013
      %v1046 = vunpack.c.l.b16 %v1014
      %v1047 = vunpack.c.l.b16 %v1015
      %v1048 = vunpack.c.l.b16 %v1016
      %v1049 = vunpack.c.l.b16 %v1017
      %v1050 = vunpack.c.l.b16 %v1018
      %v1051 = vunpack.c.l.b16 %v1019
      %v1052 = vunpack.c.l.b16 %v1020
      %v1053 = vunpack.c.l.b16 %v1021
      %v1054 = vunpack.c.l.b16 %v1022
      %v1055 = vunpack.c.l.b16 %v1023
      %v1056 = vpack.c.b16 %v1041, %v1040
      %v1057 = vpack.c.b16 %v1043, %v1042
      %v1058 = vpack.c.b16 %v1045, %v1044
      %v1059 = vpack.c.b16 %v1047, %v1046
      %v1060 = vpack.c.b16 %v1049, %v1048
      %v1061 = vpack.c.b16 %v1051, %v1050
      %v1062 = vpack.c.b16 %v1053, %v1052
      %v1063 = vpack.c.b16 %v1055, %v1054
      %1072 = vmatpush.bf16.msra.mxu0 %v1063
      %1073 = vmatpush.bf16.msra.mxu0 %v1062
      %1074 = vmatpush.bf16.msra.mxu0 %v1061
      %1075 = vmatpush.bf16.msra.mxu0 %v1060
      %1076 = vmatpush.bf16.msra.mxu0 %v1059
      %1077 = vmatpush.bf16.msra.mxu0 %v1058
      %1078 = vmatpush.bf16.msra.mxu0 %v1057
      %1079 = vmatpush.bf16.msra.mxu0 %v1056
      %1080 = vmatmul.bf16.gmra.mxu0 %v992
      %v1081 = vpop.f32.mrf.mxu0
      %v1082 = vadd.f32 0.0, %v1081
      %v1083 = vpop.f32.mrf.mxu0
      %v1084 = vadd.f32 0.0, %v1083
      %1085 = vmatmul.bf16.gmra.mxu0 %v993
      %v1086 = vpop.f32.mrf.mxu0
      %v1087 = vadd.f32 0.0, %v1086
      %v1088 = vpop.f32.mrf.mxu0
      %v1089 = vadd.f32 0.0, %v1088
      %1090 = vmatmul.bf16.gmra.mxu0 %v994
      %v1091 = vpop.f32.mrf.mxu0
      %v1092 = vadd.f32 0.0, %v1091
      %v1093 = vpop.f32.mrf.mxu0
      %v1094 = vadd.f32 0.0, %v1093
      %1095 = vmatmul.bf16.gmra.mxu0 %v995
      %v1096 = vpop.f32.mrf.mxu0
      %v1097 = vadd.f32 0.0, %v1096
      %v1098 = vpop.f32.mrf.mxu0
      %v1099 = vadd.f32 0.0, %v1098
      %1100 = vmatmul.bf16.gmra.mxu0 %v996
      %v1101 = vpop.f32.mrf.mxu0
      %v1102 = vadd.f32 0.0, %v1101
      %v1103 = vpop.f32.mrf.mxu0
      %v1104 = vadd.f32 0.0, %v1103
      %1105 = vmatmul.bf16.gmra.mxu0 %v997
      %v1106 = vpop.f32.mrf.mxu0
      %v1107 = vadd.f32 0.0, %v1106
      %v1108 = vpop.f32.mrf.mxu0
      %v1109 = vadd.f32 0.0, %v1108
      %1110 = vmatmul.bf16.gmra.mxu0 %v998
      %v1111 = vpop.f32.mrf.mxu0
      %v1112 = vadd.f32 0.0, %v1111
      %v1113 = vpop.f32.mrf.mxu0
      %v1114 = vadd.f32 0.0, %v1113
      %1115 = vmatmul.bf16.gmra.mxu0 %v999
      %v1116 = vpop.f32.mrf.mxu0
      %v1117 = vadd.f32 0.0, %v1116
      %v1118 = vpop.f32.mrf.mxu0
      %v1119 = vadd.f32 0.0, %v1118
      %1120 = vmatmul.bf16.gmra.mxu0 %v1000
      %v1121 = vpop.f32.mrf.mxu0
      %v1122 = vadd.f32 0.0, %v1121
      %v1123 = vpop.f32.mrf.mxu0
      %v1124 = vadd.f32 0.0, %v1123
      %1125 = vmatmul.bf16.gmra.mxu0 %v1001
      %v1126 = vpop.f32.mrf.mxu0
      %v1127 = vadd.f32 0.0, %v1126
      %v1128 = vpop.f32.mrf.mxu0
      %v1129 = vadd.f32 0.0, %v1128
      %1130 = vmatmul.bf16.gmra.mxu0 %v1002
      %v1131 = vpop.f32.mrf.mxu0
      %v1132 = vadd.f32 0.0, %v1131
      %v1133 = vpop.f32.mrf.mxu0
      %v1134 = vadd.f32 0.0, %v1133
      %1135 = vmatmul.bf16.gmra.mxu0 %v1003
      %v1136 = vpop.f32.mrf.mxu0
      %v1137 = vadd.f32 0.0, %v1136
      %v1138 = vpop.f32.mrf.mxu0
      %v1139 = vadd.f32 0.0, %v1138
      %1140 = vmatmul.bf16.gmra.mxu0 %v1004
      %v1141 = vpop.f32.mrf.mxu0
      %v1142 = vadd.f32 0.0, %v1141
      %v1143 = vpop.f32.mrf.mxu0
      %v1144 = vadd.f32 0.0, %v1143
      %1145 = vmatmul.bf16.gmra.mxu0 %v1005
      %v1146 = vpop.f32.mrf.mxu0
      %v1147 = vadd.f32 0.0, %v1146
      %v1148 = vpop.f32.mrf.mxu0
      %v1149 = vadd.f32 0.0, %v1148
      %1150 = vmatmul.bf16.gmra.mxu0 %v1006
      %v1151 = vpop.f32.mrf.mxu0
      %v1152 = vadd.f32 0.0, %v1151
      %v1153 = vpop.f32.mrf.mxu0
      %v1154 = vadd.f32 0.0, %v1153
      %1155 = vmatmul.bf16.gmra.mxu0 %v1007
      %v1156 = vpop.f32.mrf.mxu0
      %v1157 = vadd.f32 0.0, %v1156
      %v1158 = vpop.f32.mrf.mxu0
      %v1159 = vadd.f32 0.0, %v1158
      %1160 = vdwg.mxu0
      %1161 = vst [vmem:[%s280] sm:$0xff] %v1082
      %1162 = vst [vmem:[%s280 + $0x8] sm:$0xff] %v1084
      %1163 = vst [vmem:[%s280 + $0x10] sm:$0xff] %v1087
      %1164 = vst [vmem:[%s280 + $0x18] sm:$0xff] %v1089
      %1165 = vst [vmem:[%s280 + $0x20] sm:$0xff] %v1092
      %1166 = vst [vmem:[%s280 + $0x28] sm:$0xff] %v1094
      %1167 = vst [vmem:[%s280 + $0x30] sm:$0xff] %v1097
      %1168 = vst [vmem:[%s280 + $0x38] sm:$0xff] %v1099
      %1169 = vst [vmem:[%s280 + $0x40] sm:$0xff] %v1102
      %1170 = vst [vmem:[%s280 + $0x48] sm:$0xff] %v1104
      %1171 = vst [vmem:[%s280 + $0x50] sm:$0xff] %v1107
      %1172 = vst [vmem:[%s280 + $0x58] sm:$0xff] %v1109
      %1173 = vst [vmem:[%s280 + $0x60] sm:$0xff] %v1112
      %1174 = vst [vmem:[%s280 + $0x68] sm:$0xff] %v1114
      %1175 = vst [vmem:[%s280 + $0x70] sm:$0xff] %v1117
      %1176 = vst [vmem:[%s280 + $0x78] sm:$0xff] %v1119
      %1177 = vst [vmem:[%s280 + $0x80] sm:$0xff] %v1122
      %1178 = vst [vmem:[%s280 + $0x88] sm:$0xff] %v1124
      %1179 = vst [vmem:[%s280 + $0x90] sm:$0xff] %v1127
      %1180 = vst [vmem:[%s280 + $0x98] sm:$0xff] %v1129
      %1181 = vst [vmem:[%s280 + $0xa0] sm:$0xff] %v1132
      %1182 = vst [vmem:[%s280 + $0xa8] sm:$0xff] %v1134
      %1183 = vst [vmem:[%s280 + $0xb0] sm:$0xff] %v1137
      %1184 = vst [vmem:[%s280 + $0xb8] sm:$0xff] %v1139
      %1185 = vst [vmem:[%s280 + $0xc0] sm:$0xff] %v1142
      %1186 = vst [vmem:[%s280 + $0xc8] sm:$0xff] %v1144
      %1187 = vst [vmem:[%s280 + $0xd0] sm:$0xff] %v1147
      %1188 = vst [vmem:[%s280 + $0xd8] sm:$0xff] %v1149
      %1189 = vst [vmem:[%s280 + $0xe0] sm:$0xff] %v1152
      %1190 = vst [vmem:[%s280 + $0xe8] sm:$0xff] %v1154
      %1191 = vst [vmem:[%s280 + $0xf0] sm:$0xff] %v1157
      %1192 = vst [vmem:[%s280 + $0xf8] sm:$0xff] %v1159
      %s1193 = smul.u32 32, %s18
      %p1194 = scmp.lt.s32.totalorder %s1193, 63
      %s1195 = scalar_select %p1194, %s1193, 63
      %s1196 = smul.addr %s1195, 8
      %s1197 = scalar_lea.vmem %s7, %s1196
      // Predicated region
      $region49: #{_lambda_.3} parent=47 // pred_check
        %p1198 = pneg %p188
      $region50: #{_lambda_.3} parent=47 // pred_check_branch
        %1200 = sbr.rel (%p1198) target = $region52
      $region51: #{_lambda_.3} parent=47 // pred_region
        %s1201 = smul.u32 32, %s18
      $region52: #{_lambda_.3} parent=47 // pred_fallthru
        _
    $region48: #{_lambda_.3} parent=5 // pred_fallthru
      _
    %p1202 = scmp.le.s32.totalorder 2, %s13
    // Predicated region
    $region53: #{_lambda_.3} parent=5 // pred_check
      %p1203 = pneg %p1202
    $region54: #{_lambda_.3} parent=5 // pred_check_branch
      %1205 = sbr.rel (%p1203) target = $region56
    $region55: #{_lambda_.3} parent=5 // pred_region
      %s1206 = ssub.s32 %s13, 2
      // Predicated region
      $region57: #{_lambda_.3} parent=55 // pred_check
        %p1207 = pneg %p194
      $region58: #{_lambda_.3} parent=55 // pred_check_branch
        %1209 = sbr.rel (%p1207) target = $region60
      $region59: #{_lambda_.3} parent=55 // pred_region
        %s1210 = smul.u32 32, %s19
        %p1211 = scmp.lt.s32.totalorder %s1210, 63
        %s1212 = scalar_select %p1211, %s1210, 63
        %s1213 = smul.addr %s1212, 8
        %s1214 = scalar_lea.vmem %s7, %s1213
      $region60: #{_lambda_.3} parent=55 // pred_fallthru
        _
    $region56: #{_lambda_.3} parent=5 // pred_fallthru
      _
  $region6: #{_lambda_.3} parent=0 // loop_footer
    %s17 = sadd.s32 1, %s13
  $region7: #{_lambda_.3} parent=0 // loop_footer_branch
    %12 = sbr.rel target = $region3
  $region8: #{_lambda_.3} parent=0 // loop_exit
    _

</llo_original>
